<compile_context>
chip_gen: v7x
topology: tpu7x:2x2x1
jax: 0.10.0
libtpu: 0.0.40
codegen_flags: <defaults>
</compile_context>

<pallas_src>
import numpy as np
import jax
import jax.numpy as jnp
from jax.experimental import pallas as pl
from jax.experimental.pallas import tpu as pltpu


def _make_kernel(B, H, W, chans, kh, kw, ph, pw):
    """Builds the whole-network kernel (B images per grid step)."""
    pad_h, pad_w = (kh - 1) // 2, (kw - 1) // 2

    def conv_block(a, h, w, cin, cout, wk_ref, b_ref, pad_ref):
        # a       : (h*B, w*cin) bf16, rows (y, b), lanes (x, c)
        # wk_ref  : (kh, (w+2*pad_w)*cin, w*cout) bf16 banded weights, columns
        #           pre-permuted to (x%pw, x//pw, c) for the width pool.
        # b_ref   : (1, (w//pw)*cout) f32 folded conv+BN bias (tiled over x').
        # pad_ref : ((h+2*pad_h)*B, (w+2*pad_w)*cin) bf16 VMEM scratch.
        Hp, Wp = h + 2 * pad_h, w + 2 * pad_w

        # 'same' zero padding in VMEM: zero only the halo strips, then a single
        # contiguous interior store (rows are (y, b) => one slab).
        if pad_h:
            pad_ref[0:pad_h * B, :] = jnp.zeros((pad_h * B, Wp * cin),
                                                jnp.bfloat16)
            pad_ref[(pad_h + h) * B:Hp * B, :] = jnp.zeros(
                (pad_h * B, Wp * cin), jnp.bfloat16)
        if pad_w:
            pad_ref[:, 0:pad_w * cin] = jnp.zeros((Hp * B, pad_w * cin),
                                                  jnp.bfloat16)
            pad_ref[:, (pad_w + w) * cin:Wp * cin] = jnp.zeros(
                (Hp * B, pad_w * cin), jnp.bfloat16)
        pad_ref[pad_h * B:(pad_h + h) * B,
                pad_w * cin:(pad_w + w) * cin] = a

        # Convolution: kh accumulated MXU matmuls.  Each ki-window is a
        # contiguous sublane slice (no reshape, no concat).
        acc = None
        for ki in range(kh):
            win = pad_ref[ki * B:(ki + h) * B, :]            # (h*B, Wp*cin)
            part = jnp.dot(win, wk_ref[ki],
                           preferred_element_type=jnp.float32)
            acc = part if acc is None else acc + part        # (h*B, w*cout)

        # Width max-pool: columns are (x%pw)-major => pw contiguous lane slices.
        Lh = (w // pw) * cout
        pooled = acc[:, 0:Lh]
        for j in range(1, pw):
            pooled = jnp.maximum(pooled, acc[:, j * Lh:(j + 1) * Lh])

        # Height max-pool: rows are (y, b) => max over a small leading axis.
        if ph > 1:
            t = pooled.reshape(h // ph, ph * B, Lh)
            m = t[:, 0:B, :]
            for jh in range(1, ph):
                m = jnp.maximum(m, t[:, jh * B:(jh + 1) * B, :])
            pooled = m.reshape((h // ph) * B, Lh)

        # Folded BN bias + ReLU after the pool (valid for per-channel bias).
        act = jnp.maximum(pooled + b_ref[...], 0.0)
        return act.astype(jnp.bfloat16)                      # ((h//ph)*B, Lh)

    def kernel(x_ref, w1_ref, b1_ref, w2_ref, b2_ref, w3_ref, b3_ref,
               fcw_ref, fcb_ref, o_ref, pad1_ref, pad2_ref, pad3_ref):
        h, w = H, W
        a = x_ref[...].reshape(H * B, W * chans[0])          # rows (y,b), lanes (x,c)
        layers = ((w1_ref, b1_ref, pad1_ref),
                  (w2_ref, b2_ref, pad2_ref),
                  (w3_ref, b3_ref, pad3_ref))
        for li, (wk_ref, b_ref, pad_ref) in enumerate(layers):
            a = conv_block(a, h, w, chans[li], chans[li + 1],
                           wk_ref, b_ref, pad_ref)
            h, w = h // ph, w // pw

        # Fused FC: h accumulated (B, w*c3) x (w*c3, n_pad) dots; fcw was
        # host-permuted to the kernel's (y, x, c) feature order.
        logits = jnp.dot(a[0:B, :], fcw_ref[0],
                         preferred_element_type=jnp.float32)
        for y in range(1, h):
            logits = logits + jnp.dot(a[y * B:(y + 1) * B, :], fcw_ref[y],
                                      preferred_element_type=jnp.float32)
        o_ref[...] = logits + fcb_ref[...]                   # dense (B, 128) store

    return kernel


def cnn_forward(x_nchw, params, *, kh, kw, ph, pw, batch_fold=8):
    """Fused CNN forward pass; returns (N, n_classes) f32 logits."""
    N, C, H, W = x_nchw.shape
    chans = params["chans"]
    n_classes = params["n_classes"]
    n_pad = params["fcb"].shape[1]
    pad_h, pad_w = (kh - 1) // 2, (kw - 1) // 2

    B = max(1, min(batch_fold, N))
    num_steps = -(-N // B)
    N_pad = num_steps * B

    # One cheap layout change for the whole net: NCHW -> (H, N, W*C) bf16, so
    # kernel rows are (y, b) and lanes are the merged (x, c) axis.
    x = jnp.transpose(x_nchw, (2, 0, 3, 1)).reshape(H, N, W * C)
    if N_pad != N:
        x = jnp.pad(x, ((0, 0), (0, N_pad - N), (0, 0)))
    x = x.astype(jnp.bfloat16)

    # Per-layer padded-activation scratch; total VMEM use is tiny, so the
    # default scoped VMEM limit is fine on every generation (incl. v7x).
    scratch = []
    h, w = H, W
    for li in range(3):
        scratch.append(pltpu.VMEM(((h + 2 * pad_h) * B,
                                   (w + 2 * pad_w) * chans[li]), jnp.bfloat16))
        h, w = h // ph, w // pw

    def full_spec(arr):
        shape = tuple(arr.shape)
        return pl.BlockSpec(shape, lambda g, _n=len(shape): (0,) * _n)

    args = (x, params["w1"], params["b1"], params["w2"], params["b2"],
            params["w3"], params["b3"], params["fcw"], params["fcb"])
    in_specs = [pl.BlockSpec((H, B, W * C), lambda g: (0, g, 0))]
    in_specs += [full_spec(a) for a in args[1:]]

    kernel = _make_kernel(B, H, W, chans, kh, kw, ph, pw)
    out = pl.pallas_call(
        kernel,
        out_shape=jax.ShapeDtypeStruct((N_pad, n_pad), jnp.float32),
        grid=(num_steps,),
        in_specs=in_specs,
        out_specs=pl.BlockSpec((B, n_pad), lambda g: (g, 0)),
        scratch_shapes=scratch,
        compiler_params=pltpu.CompilerParams(
            dimension_semantics=("parallel",)),
    )(*args)
    return out[:N, :n_classes]


class CNNPallas:
    """Pallas re-implementation of audiocnn.CNN (forward / inference)."""

    def __init__(self, l1channels, l2channels, l3channels, orientation,
                 in_height, in_width, in_channels, n_classes, kernelsize, key):
        if orientation == "2D":
            self.pool = (2, 2)
            self.k = (kernelsize, kernelsize)
        elif orientation in ("freq", "time"):
            # TODO(synk): as in the torch module, 'freq'/'time' assumes in_height == 1.
            self.pool = (1, 2)
            self.k = (1, kernelsize)
        else:
            raise ValueError(orientation)
        kh, kw = self.k
        ph, pw = self.pool
        pad_h, pad_w = (kh - 1) // 2, (kw - 1) // 2
        eps = 1e-5
        chans = (in_channels, l1channels, l2channels, l3channels)
        keys = jax.random.split(key, 4)
        params = {"chans": chans, "n_classes": n_classes}
        self.ref_layers = []

        h, w = in_height, in_width
        for i in range(3):
            cin, cout = chans[i], chans[i + 1]
            k_w, k_b = jax.random.split(keys[i])
            wc = 0.1 * jax.random.normal(k_w, (cout, cin, kh, kw), jnp.float32)
            b_conv = 0.05 * jax.random.normal(k_b, (cout,), jnp.float32)
            # BatchNorm2d (eval): gamma=1, beta=0, running_mean=0, running_var=1.
            gamma = jnp.ones((cout,), jnp.float32)
            beta = jnp.zeros((cout,), jnp.float32)
            mean = jnp.zeros((cout,), jnp.float32)
            var = jnp.ones((cout,), jnp.float32)
            scale = gamma / jnp.sqrt(var + eps)
            bias = beta + (b_conv - mean) * scale

            # Banded im2row weight: (kh, (w+2pad_w)*cin, w*cout), BN scale
            # folded in, output columns permuted to (x%pw, x//pw, c) so the
            # width max-pool is contiguous lane slices in the kernel.
            w_fold = np.asarray(wc * scale[:, None, None, None])   # (cout,cin,kh,kw)
            wk = np.transpose(w_fold, (2, 3, 1, 0))                 # (kh,kw,cin,cout)
            Wp = w + 2 * pad_w
            wq = w // pw
            banded = np.zeros((kh, Wp * cin, w * cout), np.float32)
            for ki in range(kh):
                for x in range(w):
                    xq, j = divmod(x, pw)
                    col0 = (j * wq + xq) * cout
                    for kj in range(kw):
                        xp = x + kj
                        banded[ki, xp * cin:(xp + 1) * cin,
                               col0:col0 + cout] = wk[ki, kj]
            params[f"w{i + 1}"] = jnp.asarray(banded, jnp.bfloat16)
            params[f"b{i + 1}"] = jnp.asarray(
                np.tile(np.asarray(bias), wq))[None, :].astype(jnp.float32)
            self.ref_layers.append(dict(w_oihw=wc, scale=scale, bias=bias))
            h, w = h // ph, w // pw

        # Fully-connected layer.
        h3, w3, c3 = h, w, chans[3]
        feat = h3 * w3 * c3
        k_w, k_b = jax.random.split(keys[3])
        fc_w = 0.1 * jax.random.normal(k_w, (n_classes, feat), jnp.float32)
        fc_b = 0.05 * jax.random.normal(k_b, (n_classes,), jnp.float32)
        n_pad_cls = ((n_classes + 127) // 128) * 128
        # Permute from torch's NCHW-flatten (c, y, x) order to the kernel's
        # (y, x, c) order, split per output row y, pad classes to 128 lanes.
        fcw = np.asarray(fc_w).reshape(n_classes, c3, h3, w3)
        fcw = np.transpose(fcw, (2, 3, 1, 0)).reshape(h3, w3 * c3, n_classes)
        fcw = np.pad(fcw, ((0, 0), (0, 0), (0, n_pad_cls - n_classes)))
        params["fcw"] = jnp.asarray(fcw, jnp.bfloat16)
        params["fcb"] = jnp.asarray(
            np.pad(np.asarray(fc_b), (0, n_pad_cls - n_classes)))[None, :].astype(jnp.float32)

        self.params = params
        self.fc_w, self.fc_b = fc_w, fc_b

    def __call__(self, x_nchw, batch_fold=8):
        kh, kw = self.k
        ph, pw = self.pool
        return cnn_forward(x_nchw, self.params, kh=kh, kw=kw, ph=ph, pw=pw,
                           batch_fold=batch_fold)

    def reference(self, x_nchw):
        """Pure-JAX (f32) reference of the same forward pass."""
        kh, kw = self.k
        ph, pw = self.pool
        pad_h, pad_w = (kh - 1) // 2, (kw - 1) // 2
        y = x_nchw
        for lyr in self.ref_layers:
            y = jax.lax.conv_general_dilated(
                y, lyr["w_oihw"], (1, 1),
                ((pad_h, pad_h), (pad_w, pad_w)),
                dimension_numbers=("NCHW", "OIHW", "NCHW"),
                precision=jax.lax.Precision.HIGHEST)
            y = (y * lyr["scale"][None, :, None, None]
                 + lyr["bias"][None, :, None, None])
            y = jnp.maximum(y, 0.0)
            y = jax.lax.reduce_window(y, -jnp.inf, jax.lax.max,
                                      (1, 1, ph, pw), (1, 1, ph, pw), "VALID")
        y = y.reshape(y.shape[0], -1)
        return y @ self.fc_w.T + self.fc_b[None, :]


if __name__ == "__main__":
    key = jax.random.PRNGKey(0)
    k_in, k_par = jax.random.split(key)

    N, C, Hin, Win = 2, 4, 16, 16
    model = CNNPallas(l1channels=8, l2channels=16, l3channels=16,
                      orientation="2D", in_height=Hin, in_width=Win,
                      in_channels=C, n_classes=5, kernelsize=3, key=k_par)

    x = jax.random.normal(k_in, (N, C, Hin, Win), jnp.float32)

    out = jax.block_until_ready(model(x))
    ref = model.reference(x)

    assert out.shape == (N, 5), out.shape
    max_diff = float(jnp.max(jnp.abs(out - ref)))
    # bf16 matmul inputs (f32 accumulation) vs. a pure-f32 reference.
    assert jnp.allclose(out, ref, atol=5e-2, rtol=5e-2), (
        "max abs diff = %g" % max_diff)

    print("KERNEL_OK")
</pallas_src>

<mosaic_0001>
module attributes {stable_mosaic.version = 11 : i64} {
  func.func @kernel(%arg0: i32, %arg1: memref<16x2x64xbf16, #tpu.memory_space<vmem>>, %arg2: memref<3x72x128xbf16, #tpu.memory_space<vmem>>, %arg3: memref<1x64xf32, #tpu.memory_space<vmem>>, %arg4: memref<3x80x128xbf16, #tpu.memory_space<vmem>>, %arg5: memref<1x64xf32, #tpu.memory_space<vmem>>, %arg6: memref<3x96x64xbf16, #tpu.memory_space<vmem>>, %arg7: memref<1x32xf32, #tpu.memory_space<vmem>>, %arg8: memref<2x32x128xbf16, #tpu.memory_space<vmem>>, %arg9: memref<1x128xf32, #tpu.memory_space<vmem>>, %arg10: memref<2x128xf32, #tpu.memory_space<vmem>>, %arg11: memref<36x72xbf16, #tpu.memory_space<vmem>>, %arg12: memref<20x80xbf16, #tpu.memory_space<vmem>>, %arg13: memref<12x96xbf16, #tpu.memory_space<vmem>>) attributes {dimension_semantics = [#tpu.dimension_semantics<parallel>], iteration_bounds = array<i64: 1>, scalar_prefetch = 0 : i64, scratch_operands = 3 : i64, tpu.core_type = #tpu.core_type<tc>, window_params = [{transform_indices = @transform_0, window_bounds = array<i64: 16, 2, 64>}, {pipeline_mode = #tpu.pipeline_mode<synchronous>, transform_indices = @transform_1, window_bounds = array<i64: 3, 72, 128>}, {pipeline_mode = #tpu.pipeline_mode<synchronous>, transform_indices = @transform_2, window_bounds = array<i64: 1, 64>}, {pipeline_mode = #tpu.pipeline_mode<synchronous>, transform_indices = @transform_3, window_bounds = array<i64: 3, 80, 128>}, {pipeline_mode = #tpu.pipeline_mode<synchronous>, transform_indices = @transform_4, window_bounds = array<i64: 1, 64>}, {pipeline_mode = #tpu.pipeline_mode<synchronous>, transform_indices = @transform_5, window_bounds = array<i64: 3, 96, 64>}, {pipeline_mode = #tpu.pipeline_mode<synchronous>, transform_indices = @transform_6, window_bounds = array<i64: 1, 32>}, {pipeline_mode = #tpu.pipeline_mode<synchronous>, transform_indices = @transform_7, window_bounds = array<i64: 2, 32, 128>}, {pipeline_mode = #tpu.pipeline_mode<synchronous>, transform_indices = @transform_8, window_bounds = array<i64: 1, 128>}, {transform_indices = @transform_9, window_bounds = array<i64: 2, 128>}]} {
    %c0 = arith.constant 0 : index
    %c0_0 = arith.constant 0 : index
    %c0_1 = arith.constant 0 : index
    %0 = vector.load %arg1[%c0, %c0_0, %c0_1] : memref<16x2x64xbf16, #tpu.memory_space<vmem>>, vector<16x2x64xbf16>
    %1 = vector.shape_cast %0 : vector<16x2x64xbf16> to vector<32x64xbf16>
    %cst = arith.constant 0.000000e+00 : bf16
    %2 = vector.broadcast %cst : bf16 to vector<2x72xbf16>
    %c0_2 = arith.constant 0 : index
    %c0_3 = arith.constant 0 : index
    %3 = vector.load %arg11[%c0_2, %c0_3] : memref<36x72xbf16, #tpu.memory_space<vmem>>, vector<2x72xbf16>
    tpu.vector_store %arg11[%c0_2, %c0_3], %2 {strides = array<i32>} : memref<36x72xbf16, #tpu.memory_space<vmem>>, vector<2x72xbf16>,
    %cst_4 = arith.constant 0.000000e+00 : bf16
    %4 = vector.broadcast %cst_4 : bf16 to vector<2x72xbf16>
    %c34 = arith.constant 34 : index
    %c0_5 = arith.constant 0 : index
    %5 = vector.load %arg11[%c34, %c0_5] : memref<36x72xbf16, #tpu.memory_space<vmem>>, vector<2x72xbf16>
    tpu.vector_store %arg11[%c34, %c0_5], %4 {strides = array<i32>} : memref<36x72xbf16, #tpu.memory_space<vmem>>, vector<2x72xbf16>,
    %cst_6 = arith.constant 0.000000e+00 : bf16
    %6 = vector.broadcast %cst_6 : bf16 to vector<36x4xbf16>
    %c0_7 = arith.constant 0 : index
    %c0_8 = arith.constant 0 : index
    %7 = vector.load %arg11[%c0_7, %c0_8] : memref<36x72xbf16, #tpu.memory_space<vmem>>, vector<36x4xbf16>
    tpu.vector_store %arg11[%c0_7, %c0_8], %6 {strides = array<i32>} : memref<36x72xbf16, #tpu.memory_space<vmem>>, vector<36x4xbf16>,
    %cst_9 = arith.constant 0.000000e+00 : bf16
    %8 = vector.broadcast %cst_9 : bf16 to vector<36x4xbf16>
    %c0_10 = arith.constant 0 : index
    %c68 = arith.constant 68 : index
    %9 = vector.load %arg11[%c0_10, %c68] : memref<36x72xbf16, #tpu.memory_space<vmem>>, vector<36x4xbf16>
    tpu.vector_store %arg11[%c0_10, %c68], %8 {strides = array<i32>} : memref<36x72xbf16, #tpu.memory_space<vmem>>, vector<36x4xbf16>,
    %c2 = arith.constant 2 : index
    %c4 = arith.constant 4 : index
    %10 = vector.load %arg11[%c2, %c4] : memref<36x72xbf16, #tpu.memory_space<vmem>>, vector<32x64xbf16>
    tpu.vector_store %arg11[%c2, %c4], %1 {strides = array<i32>} : memref<36x72xbf16, #tpu.memory_space<vmem>>, vector<32x64xbf16>,
    %c0_11 = arith.constant 0 : index
    %c0_12 = arith.constant 0 : index
    %11 = vector.load %arg11[%c0_11, %c0_12] : memref<36x72xbf16, #tpu.memory_space<vmem>>, vector<32x72xbf16>
    %c0_13 = arith.constant 0 : index
    %c0_14 = arith.constant 0 : index
    %c0_15 = arith.constant 0 : index
    %12 = vector.load %arg2[%c0_13, %c0_14, %c0_15] : memref<3x72x128xbf16, #tpu.memory_space<vmem>>, vector<1x72x128xbf16>
    %13 = vector.shape_cast %12 : vector<1x72x128xbf16> to vector<72x128xbf16>
    %cst_16 = arith.constant dense<0.000000e+00> : vector<32x128xf32>
    %14 = tpu.matmul %11, %13, %cst_16 {dimension_numbers = #tpu.dot_dimension_numbers<[1], [0], [0], [1], [0, 0, 1, 1], [], []>} : vector<32x72xbf16>, vector<72x128xbf16>, vector<32x128xf32> -> vector<32x128xf32>
    %c2_17 = arith.constant 2 : index
    %c0_18 = arith.constant 0 : index
    %15 = vector.load %arg11[%c2_17, %c0_18] : memref<36x72xbf16, #tpu.memory_space<vmem>>, vector<32x72xbf16>
    %c1 = arith.constant 1 : index
    %c0_19 = arith.constant 0 : index
    %c0_20 = arith.constant 0 : index
    %16 = vector.load %arg2[%c1, %c0_19, %c0_20] : memref<3x72x128xbf16, #tpu.memory_space<vmem>>, vector<1x72x128xbf16>
    %17 = vector.shape_cast %16 : vector<1x72x128xbf16> to vector<72x128xbf16>
    %cst_21 = arith.constant dense<0.000000e+00> : vector<32x128xf32>
    %18 = tpu.matmul %15, %17, %cst_21 {dimension_numbers = #tpu.dot_dimension_numbers<[1], [0], [0], [1], [0, 0, 1, 1], [], []>} : vector<32x72xbf16>, vector<72x128xbf16>, vector<32x128xf32> -> vector<32x128xf32>
    %19 = arith.addf %14, %18 : vector<32x128xf32>
    %c4_22 = arith.constant 4 : index
    %c0_23 = arith.constant 0 : index
    %20 = vector.load %arg11[%c4_22, %c0_23] : memref<36x72xbf16, #tpu.memory_space<vmem>>, vector<32x72xbf16>
    %c2_24 = arith.constant 2 : index
    %c0_25 = arith.constant 0 : index
    %c0_26 = arith.constant 0 : index
    %21 = vector.load %arg2[%c2_24, %c0_25, %c0_26] : memref<3x72x128xbf16, #tpu.memory_space<vmem>>, vector<1x72x128xbf16>
    %22 = vector.shape_cast %21 : vector<1x72x128xbf16> to vector<72x128xbf16>
    %cst_27 = arith.constant dense<0.000000e+00> : vector<32x128xf32>
    %23 = tpu.matmul %20, %22, %cst_27 {dimension_numbers = #tpu.dot_dimension_numbers<[1], [0], [0], [1], [0, 0, 1, 1], [], []>} : vector<32x72xbf16>, vector<72x128xbf16>, vector<32x128xf32> -> vector<32x128xf32>
    %24 = arith.addf %19, %23 : vector<32x128xf32>
    %25 = vector.extract_strided_slice %24 {offsets = [0, 0], sizes = [32, 64], strides = [1, 1]} : vector<32x128xf32> to vector<32x64xf32>
    %26 = vector.extract_strided_slice %24 {offsets = [0, 64], sizes = [32, 64], strides = [1, 1]} : vector<32x128xf32> to vector<32x64xf32>
    %27 = arith.maximumf %25, %26 : vector<32x64xf32>
    %28 = vector.shape_cast %27 : vector<32x64xf32> to vector<8x4x64xf32>
    %29 = vector.extract_strided_slice %28 {offsets = [0, 0, 0], sizes = [8, 2, 64], strides = [1, 1, 1]} : vector<8x4x64xf32> to vector<8x2x64xf32>
    %30 = vector.extract_strided_slice %28 {offsets = [0, 2, 0], sizes = [8, 2, 64], strides = [1, 1, 1]} : vector<8x4x64xf32> to vector<8x2x64xf32>
    %31 = arith.maximumf %29, %30 : vector<8x2x64xf32>
    %32 = vector.shape_cast %31 : vector<8x2x64xf32> to vector<16x64xf32>
    %c0_28 = arith.constant 0 : index
    %c0_29 = arith.constant 0 : index
    %33 = vector.load %arg3[%c0_28, %c0_29] : memref<1x64xf32, #tpu.memory_space<vmem>>, vector<1x64xf32>
    %34 = vector.broadcast %33 : vector<1x64xf32> to vector<16x64xf32>
    %35 = arith.addf %32, %34 : vector<16x64xf32>
    %cst_30 = arith.constant 0.000000e+00 : f32
    %36 = vector.broadcast %cst_30 : f32 to vector<16x64xf32>
    %37 = arith.maximumf %35, %36 : vector<16x64xf32>
    %38 = arith.truncf %37 : vector<16x64xf32> to vector<16x64xbf16>
    %cst_31 = arith.constant 0.000000e+00 : bf16
    %39 = vector.broadcast %cst_31 : bf16 to vector<2x80xbf16>
    %c0_32 = arith.constant 0 : index
    %c0_33 = arith.constant 0 : index
    %40 = vector.load %arg12[%c0_32, %c0_33] : memref<20x80xbf16, #tpu.memory_space<vmem>>, vector<2x80xbf16>
    tpu.vector_store %arg12[%c0_32, %c0_33], %39 {strides = array<i32>} : memref<20x80xbf16, #tpu.memory_space<vmem>>, vector<2x80xbf16>,
    %cst_34 = arith.constant 0.000000e+00 : bf16
    %41 = vector.broadcast %cst_34 : bf16 to vector<2x80xbf16>
    %c18 = arith.constant 18 : index
    %c0_35 = arith.constant 0 : index
    %42 = vector.load %arg12[%c18, %c0_35] : memref<20x80xbf16, #tpu.memory_space<vmem>>, vector<2x80xbf16>
    tpu.vector_store %arg12[%c18, %c0_35], %41 {strides = array<i32>} : memref<20x80xbf16, #tpu.memory_space<vmem>>, vector<2x80xbf16>,
    %cst_36 = arith.constant 0.000000e+00 : bf16
    %43 = vector.broadcast %cst_36 : bf16 to vector<20x8xbf16>
    %c0_37 = arith.constant 0 : index
    %c0_38 = arith.constant 0 : index
    %44 = vector.load %arg12[%c0_37, %c0_38] : memref<20x80xbf16, #tpu.memory_space<vmem>>, vector<20x8xbf16>
    tpu.vector_store %arg12[%c0_37, %c0_38], %43 {strides = array<i32>} : memref<20x80xbf16, #tpu.memory_space<vmem>>, vector<20x8xbf16>,
    %cst_39 = arith.constant 0.000000e+00 : bf16
    %45 = vector.broadcast %cst_39 : bf16 to vector<20x8xbf16>
    %c0_40 = arith.constant 0 : index
    %c72 = arith.constant 72 : index
    %46 = vector.load %arg12[%c0_40, %c72] : memref<20x80xbf16, #tpu.memory_space<vmem>>, vector<20x8xbf16>
    tpu.vector_store %arg12[%c0_40, %c72], %45 {strides = array<i32>} : memref<20x80xbf16, #tpu.memory_space<vmem>>, vector<20x8xbf16>,
    %c2_41 = arith.constant 2 : index
    %c8 = arith.constant 8 : index
    %47 = vector.load %arg12[%c2_41, %c8] : memref<20x80xbf16, #tpu.memory_space<vmem>>, vector<16x64xbf16>
    tpu.vector_store %arg12[%c2_41, %c8], %38 {strides = array<i32>} : memref<20x80xbf16, #tpu.memory_space<vmem>>, vector<16x64xbf16>,
    %c0_42 = arith.constant 0 : index
    %c0_43 = arith.constant 0 : index
    %48 = vector.load %arg12[%c0_42, %c0_43] : memref<20x80xbf16, #tpu.memory_space<vmem>>, vector<16x80xbf16>
    %c0_44 = arith.constant 0 : index
    %c0_45 = arith.constant 0 : index
    %c0_46 = arith.constant 0 : index
    %49 = vector.load %arg4[%c0_44, %c0_45, %c0_46] : memref<3x80x128xbf16, #tpu.memory_space<vmem>>, vector<1x80x128xbf16>
    %50 = vector.shape_cast %49 : vector<1x80x128xbf16> to vector<80x128xbf16>
    %cst_47 = arith.constant dense<0.000000e+00> : vector<16x128xf32>
    %51 = tpu.matmul %48, %50, %cst_47 {dimension_numbers = #tpu.dot_dimension_numbers<[1], [0], [0], [1], [0, 0, 1, 1], [], []>} : vector<16x80xbf16>, vector<80x128xbf16>, vector<16x128xf32> -> vector<16x128xf32>
    %c2_48 = arith.constant 2 : index
    %c0_49 = arith.constant 0 : index
    %52 = vector.load %arg12[%c2_48, %c0_49] : memref<20x80xbf16, #tpu.memory_space<vmem>>, vector<16x80xbf16>
    %c1_50 = arith.constant 1 : index
    %c0_51 = arith.constant 0 : index
    %c0_52 = arith.constant 0 : index
    %53 = vector.load %arg4[%c1_50, %c0_51, %c0_52] : memref<3x80x128xbf16, #tpu.memory_space<vmem>>, vector<1x80x128xbf16>
    %54 = vector.shape_cast %53 : vector<1x80x128xbf16> to vector<80x128xbf16>
    %cst_53 = arith.constant dense<0.000000e+00> : vector<16x128xf32>
    %55 = tpu.matmul %52, %54, %cst_53 {dimension_numbers = #tpu.dot_dimension_numbers<[1], [0], [0], [1], [0, 0, 1, 1], [], []>} : vector<16x80xbf16>, vector<80x128xbf16>, vector<16x128xf32> -> vector<16x128xf32>
    %56 = arith.addf %51, %55 : vector<16x128xf32>
    %c4_54 = arith.constant 4 : index
    %c0_55 = arith.constant 0 : index
    %57 = vector.load %arg12[%c4_54, %c0_55] : memref<20x80xbf16, #tpu.memory_space<vmem>>, vector<16x80xbf16>
    %c2_56 = arith.constant 2 : index
    %c0_57 = arith.constant 0 : index
    %c0_58 = arith.constant 0 : index
    %58 = vector.load %arg4[%c2_56, %c0_57, %c0_58] : memref<3x80x128xbf16, #tpu.memory_space<vmem>>, vector<1x80x128xbf16>
    %59 = vector.shape_cast %58 : vector<1x80x128xbf16> to vector<80x128xbf16>
    %cst_59 = arith.constant dense<0.000000e+00> : vector<16x128xf32>
    %60 = tpu.matmul %57, %59, %cst_59 {dimension_numbers = #tpu.dot_dimension_numbers<[1], [0], [0], [1], [0, 0, 1, 1], [], []>} : vector<16x80xbf16>, vector<80x128xbf16>, vector<16x128xf32> -> vector<16x128xf32>
    %61 = arith.addf %56, %60 : vector<16x128xf32>
    %62 = vector.extract_strided_slice %61 {offsets = [0, 0], sizes = [16, 64], strides = [1, 1]} : vector<16x128xf32> to vector<16x64xf32>
    %63 = vector.extract_strided_slice %61 {offsets = [0, 64], sizes = [16, 64], strides = [1, 1]} : vector<16x128xf32> to vector<16x64xf32>
    %64 = arith.maximumf %62, %63 : vector<16x64xf32>
    %65 = vector.shape_cast %64 : vector<16x64xf32> to vector<4x4x64xf32>
    %66 = vector.extract_strided_slice %65 {offsets = [0, 0, 0], sizes = [4, 2, 64], strides = [1, 1, 1]} : vector<4x4x64xf32> to vector<4x2x64xf32>
    %67 = vector.extract_strided_slice %65 {offsets = [0, 2, 0], sizes = [4, 2, 64], strides = [1, 1, 1]} : vector<4x4x64xf32> to vector<4x2x64xf32>
    %68 = arith.maximumf %66, %67 : vector<4x2x64xf32>
    %69 = vector.shape_cast %68 : vector<4x2x64xf32> to vector<8x64xf32>
    %c0_60 = arith.constant 0 : index
    %c0_61 = arith.constant 0 : index
    %70 = vector.load %arg5[%c0_60, %c0_61] : memref<1x64xf32, #tpu.memory_space<vmem>>, vector<1x64xf32>
    %71 = vector.broadcast %70 : vector<1x64xf32> to vector<8x64xf32>
    %72 = arith.addf %69, %71 : vector<8x64xf32>
    %cst_62 = arith.constant 0.000000e+00 : f32
    %73 = vector.broadcast %cst_62 : f32 to vector<8x64xf32>
    %74 = arith.maximumf %72, %73 : vector<8x64xf32>
    %75 = arith.truncf %74 : vector<8x64xf32> to vector<8x64xbf16>
    %cst_63 = arith.constant 0.000000e+00 : bf16
    %76 = vector.broadcast %cst_63 : bf16 to vector<2x96xbf16>
    %c0_64 = arith.constant 0 : index
    %c0_65 = arith.constant 0 : index
    %77 = vector.load %arg13[%c0_64, %c0_65] : memref<12x96xbf16, #tpu.memory_space<vmem>>, vector<2x96xbf16>
    tpu.vector_store %arg13[%c0_64, %c0_65], %76 {strides = array<i32>} : memref<12x96xbf16, #tpu.memory_space<vmem>>, vector<2x96xbf16>,
    %cst_66 = arith.constant 0.000000e+00 : bf16
    %78 = vector.broadcast %cst_66 : bf16 to vector<2x96xbf16>
    %c10 = arith.constant 10 : index
    %c0_67 = arith.constant 0 : index
    %79 = vector.load %arg13[%c10, %c0_67] : memref<12x96xbf16, #tpu.memory_space<vmem>>, vector<2x96xbf16>
    tpu.vector_store %arg13[%c10, %c0_67], %78 {strides = array<i32>} : memref<12x96xbf16, #tpu.memory_space<vmem>>, vector<2x96xbf16>,
    %cst_68 = arith.constant 0.000000e+00 : bf16
    %80 = vector.broadcast %cst_68 : bf16 to vector<12x16xbf16>
    %c0_69 = arith.constant 0 : index
    %c0_70 = arith.constant 0 : index
    %81 = vector.load %arg13[%c0_69, %c0_70] : memref<12x96xbf16, #tpu.memory_space<vmem>>, vector<12x16xbf16>
    tpu.vector_store %arg13[%c0_69, %c0_70], %80 {strides = array<i32>} : memref<12x96xbf16, #tpu.memory_space<vmem>>, vector<12x16xbf16>,
    %cst_71 = arith.constant 0.000000e+00 : bf16
    %82 = vector.broadcast %cst_71 : bf16 to vector<12x16xbf16>
    %c0_72 = arith.constant 0 : index
    %c80 = arith.constant 80 : index
    %83 = vector.load %arg13[%c0_72, %c80] : memref<12x96xbf16, #tpu.memory_space<vmem>>, vector<12x16xbf16>
    tpu.vector_store %arg13[%c0_72, %c80], %82 {strides = array<i32>} : memref<12x96xbf16, #tpu.memory_space<vmem>>, vector<12x16xbf16>,
    %c2_73 = arith.constant 2 : index
    %c16 = arith.constant 16 : index
    %84 = vector.load %arg13[%c2_73, %c16] : memref<12x96xbf16, #tpu.memory_space<vmem>>, vector<8x64xbf16>
    tpu.vector_store %arg13[%c2_73, %c16], %75 {strides = array<i32>} : memref<12x96xbf16, #tpu.memory_space<vmem>>, vector<8x64xbf16>,
    %c0_74 = arith.constant 0 : index
    %c0_75 = arith.constant 0 : index
    %85 = vector.load %arg13[%c0_74, %c0_75] : memref<12x96xbf16, #tpu.memory_space<vmem>>, vector<8x96xbf16>
    %c0_76 = arith.constant 0 : index
    %c0_77 = arith.constant 0 : index
    %c0_78 = arith.constant 0 : index
    %86 = vector.load %arg6[%c0_76, %c0_77, %c0_78] : memref<3x96x64xbf16, #tpu.memory_space<vmem>>, vector<1x96x64xbf16>
    %87 = vector.shape_cast %86 : vector<1x96x64xbf16> to vector<96x64xbf16>
    %cst_79 = arith.constant dense<0.000000e+00> : vector<8x64xf32>
    %88 = tpu.matmul %85, %87, %cst_79 {dimension_numbers = #tpu.dot_dimension_numbers<[1], [0], [0], [1], [0, 0, 1, 1], [], []>} : vector<8x96xbf16>, vector<96x64xbf16>, vector<8x64xf32> -> vector<8x64xf32>
    %c2_80 = arith.constant 2 : index
    %c0_81 = arith.constant 0 : index
    %89 = vector.load %arg13[%c2_80, %c0_81] : memref<12x96xbf16, #tpu.memory_space<vmem>>, vector<8x96xbf16>
    %c1_82 = arith.constant 1 : index
    %c0_83 = arith.constant 0 : index
    %c0_84 = arith.constant 0 : index
    %90 = vector.load %arg6[%c1_82, %c0_83, %c0_84] : memref<3x96x64xbf16, #tpu.memory_space<vmem>>, vector<1x96x64xbf16>
    %91 = vector.shape_cast %90 : vector<1x96x64xbf16> to vector<96x64xbf16>
    %cst_85 = arith.constant dense<0.000000e+00> : vector<8x64xf32>
    %92 = tpu.matmul %89, %91, %cst_85 {dimension_numbers = #tpu.dot_dimension_numbers<[1], [0], [0], [1], [0, 0, 1, 1], [], []>} : vector<8x96xbf16>, vector<96x64xbf16>, vector<8x64xf32> -> vector<8x64xf32>
    %93 = arith.addf %88, %92 : vector<8x64xf32>
    %c4_86 = arith.constant 4 : index
    %c0_87 = arith.constant 0 : index
    %94 = vector.load %arg13[%c4_86, %c0_87] : memref<12x96xbf16, #tpu.memory_space<vmem>>, vector<8x96xbf16>
    %c2_88 = arith.constant 2 : index
    %c0_89 = arith.constant 0 : index
    %c0_90 = arith.constant 0 : index
    %95 = vector.load %arg6[%c2_88, %c0_89, %c0_90] : memref<3x96x64xbf16, #tpu.memory_space<vmem>>, vector<1x96x64xbf16>
    %96 = vector.shape_cast %95 : vector<1x96x64xbf16> to vector<96x64xbf16>
    %cst_91 = arith.constant dense<0.000000e+00> : vector<8x64xf32>
    %97 = tpu.matmul %94, %96, %cst_91 {dimension_numbers = #tpu.dot_dimension_numbers<[1], [0], [0], [1], [0, 0, 1, 1], [], []>} : vector<8x96xbf16>, vector<96x64xbf16>, vector<8x64xf32> -> vector<8x64xf32>
    %98 = arith.addf %93, %97 : vector<8x64xf32>
    %99 = vector.extract_strided_slice %98 {offsets = [0, 0], sizes = [8, 32], strides = [1, 1]} : vector<8x64xf32> to vector<8x32xf32>
    %100 = vector.extract_strided_slice %98 {offsets = [0, 32], sizes = [8, 32], strides = [1, 1]} : vector<8x64xf32> to vector<8x32xf32>
    %101 = arith.maximumf %99, %100 : vector<8x32xf32>
    %102 = vector.shape_cast %101 : vector<8x32xf32> to vector<2x4x32xf32>
    %103 = vector.extract_strided_slice %102 {offsets = [0, 0, 0], sizes = [2, 2, 32], strides = [1, 1, 1]} : vector<2x4x32xf32> to vector<2x2x32xf32>
    %104 = vector.extract_strided_slice %102 {offsets = [0, 2, 0], sizes = [2, 2, 32], strides = [1, 1, 1]} : vector<2x4x32xf32> to vector<2x2x32xf32>
    %105 = arith.maximumf %103, %104 : vector<2x2x32xf32>
    %106 = vector.shape_cast %105 : vector<2x2x32xf32> to vector<4x32xf32>
    %c0_92 = arith.constant 0 : index
    %c0_93 = arith.constant 0 : index
    %107 = vector.load %arg7[%c0_92, %c0_93] : memref<1x32xf32, #tpu.memory_space<vmem>>, vector<1x32xf32>
    %108 = vector.broadcast %107 : vector<1x32xf32> to vector<4x32xf32>
    %109 = arith.addf %106, %108 : vector<4x32xf32>
    %cst_94 = arith.constant 0.000000e+00 : f32
    %110 = vector.broadcast %cst_94 : f32 to vector<4x32xf32>
    %111 = arith.maximumf %109, %110 : vector<4x32xf32>
    %112 = arith.truncf %111 : vector<4x32xf32> to vector<4x32xbf16>
    %113 = vector.extract_strided_slice %112 {offsets = [0, 0], sizes = [2, 32], strides = [1, 1]} : vector<4x32xbf16> to vector<2x32xbf16>
    %c0_95 = arith.constant 0 : index
    %c0_96 = arith.constant 0 : index
    %c0_97 = arith.constant 0 : index
    %114 = vector.load %arg8[%c0_95, %c0_96, %c0_97] : memref<2x32x128xbf16, #tpu.memory_space<vmem>>, vector<1x32x128xbf16>
    %115 = vector.shape_cast %114 : vector<1x32x128xbf16> to vector<32x128xbf16>
    %cst_98 = arith.constant dense<0.000000e+00> : vector<2x128xf32>
    %116 = tpu.matmul %113, %115, %cst_98 {dimension_numbers = #tpu.dot_dimension_numbers<[1], [0], [0], [1], [0, 0, 1, 1], [], []>} : vector<2x32xbf16>, vector<32x128xbf16>, vector<2x128xf32> -> vector<2x128xf32>
    %117 = vector.extract_strided_slice %112 {offsets = [2, 0], sizes = [2, 32], strides = [1, 1]} : vector<4x32xbf16> to vector<2x32xbf16>
    %c1_99 = arith.constant 1 : index
    %c0_100 = arith.constant 0 : index
    %c0_101 = arith.constant 0 : index
    %118 = vector.load %arg8[%c1_99, %c0_100, %c0_101] : memref<2x32x128xbf16, #tpu.memory_space<vmem>>, vector<1x32x128xbf16>
    %119 = vector.shape_cast %118 : vector<1x32x128xbf16> to vector<32x128xbf16>
    %cst_102 = arith.constant dense<0.000000e+00> : vector<2x128xf32>
    %120 = tpu.matmul %117, %119, %cst_102 {dimension_numbers = #tpu.dot_dimension_numbers<[1], [0], [0], [1], [0, 0, 1, 1], [], []>} : vector<2x32xbf16>, vector<32x128xbf16>, vector<2x128xf32> -> vector<2x128xf32>
    %121 = arith.addf %116, %120 : vector<2x128xf32>
    %c0_103 = arith.constant 0 : index
    %c0_104 = arith.constant 0 : index
    %122 = vector.load %arg9[%c0_103, %c0_104] : memref<1x128xf32, #tpu.memory_space<vmem>>, vector<1x128xf32>
    %123 = vector.broadcast %122 : vector<1x128xf32> to vector<2x128xf32>
    %124 = arith.addf %121, %123 : vector<2x128xf32>
    %c0_105 = arith.constant 0 : index
    %c0_106 = arith.constant 0 : index
    %125 = vector.load %arg10[%c0_105, %c0_106] : memref<2x128xf32, #tpu.memory_space<vmem>>, vector<2x128xf32>
    tpu.vector_store %arg10[%c0_105, %c0_106], %124 {strides = array<i32>} : memref<2x128xf32, #tpu.memory_space<vmem>>, vector<2x128xf32>,
    return
  }
  func.func @transform_0(%arg0: i32) -> (i32, i32, i32) {
    %c0_i32 = arith.constant 0 : i32
    %c0_i32_0 = arith.constant 0 : i32
    %c0_i32_1 = arith.constant 0 : i32
    return %c0_i32, %arg0, %c0_i32_0 : i32, i32, i32
  }
  func.func @transform_1(%arg0: i32) -> (i32, i32, i32) {
    %c0_i32 = arith.constant 0 : i32
    %c0_i32_0 = arith.constant 0 : i32
    %c0_i32_1 = arith.constant 0 : i32
    %c0_i32_2 = arith.constant 0 : i32
    return %c0_i32, %c0_i32_0, %c0_i32_1 : i32, i32, i32
  }
  func.func @transform_2(%arg0: i32) -> (i32, i32) {
    %c0_i32 = arith.constant 0 : i32
    %c0_i32_0 = arith.constant 0 : i32
    %c0_i32_1 = arith.constant 0 : i32
    return %c0_i32, %c0_i32_0 : i32, i32
  }
  func.func @transform_3(%arg0: i32) -> (i32, i32, i32) {
    %c0_i32 = arith.constant 0 : i32
    %c0_i32_0 = arith.constant 0 : i32
    %c0_i32_1 = arith.constant 0 : i32
    %c0_i32_2 = arith.constant 0 : i32
    return %c0_i32, %c0_i32_0, %c0_i32_1 : i32, i32, i32
  }
  func.func @transform_4(%arg0: i32) -> (i32, i32) {
    %c0_i32 = arith.constant 0 : i32
    %c0_i32_0 = arith.constant 0 : i32
    %c0_i32_1 = arith.constant 0 : i32
    return %c0_i32, %c0_i32_0 : i32, i32
  }
  func.func @transform_5(%arg0: i32) -> (i32, i32, i32) {
    %c0_i32 = arith.constant 0 : i32
    %c0_i32_0 = arith.constant 0 : i32
    %c0_i32_1 = arith.constant 0 : i32
    %c0_i32_2 = arith.constant 0 : i32
    return %c0_i32, %c0_i32_0, %c0_i32_1 : i32, i32, i32
  }
  func.func @transform_6(%arg0: i32) -> (i32, i32) {
    %c0_i32 = arith.constant 0 : i32
    %c0_i32_0 = arith.constant 0 : i32
    %c0_i32_1 = arith.constant 0 : i32
    return %c0_i32, %c0_i32_0 : i32, i32
  }
  func.func @transform_7(%arg0: i32) -> (i32, i32, i32) {
    %c0_i32 = arith.constant 0 : i32
    %c0_i32_0 = arith.constant 0 : i32
    %c0_i32_1 = arith.constant 0 : i32
    %c0_i32_2 = arith.constant 0 : i32
    return %c0_i32, %c0_i32_0, %c0_i32_1 : i32, i32, i32
  }
  func.func @transform_8(%arg0: i32) -> (i32, i32) {
    %c0_i32 = arith.constant 0 : i32
    %c0_i32_0 = arith.constant 0 : i32
    %c0_i32_1 = arith.constant 0 : i32
    return %c0_i32, %c0_i32_0 : i32, i32
  }
  func.func @transform_9(%arg0: i32) -> (i32, i32) {
    %c0_i32 = arith.constant 0 : i32
    %c0_i32_0 = arith.constant 0 : i32
    return %arg0, %c0_i32 : i32, i32
  }
}

</mosaic_0001>

<llo_original>
// kernel: tpu_custom_call.1
$region0: #{tpu_custom_call.1}
  #allocation0 [shape = 'u32[]', space=smem, size = 0x4, offset = 0x4, fixed_abs, tag = 'smem constant byte address 0x4 - core index']
  #allocation1 [shape = 'u32[144,128]{1,0:T(1,128)}', space=vmem, size = 0x12000, scoped, tag = 'internal scratch']
  #allocation2 [shape = 'bf16[36,72]{1,0:T(8,128)(2,1)}', space=vmem, size = 0x2800, scoped, tag = 'scratch operand']
  #allocation3 [shape = 'bf16[20,80]{1,0:T(8,128)(2,1)}', space=vmem, size = 0x1800, scoped, tag = 'scratch operand']
  #allocation4 [shape = 'bf16[12,96]{1,0:T(8,128)(2,1)}', space=vmem, size = 0x1000, scoped, tag = 'scratch operand']
  %s0 = inlined_call_operand.hbm [shape: bf16[16,2,64], index: 0, kind: input, shape index: {}]
  %s1 = inlined_call_operand.vmem [shape: bf16[3,72,128], index: 1, kind: input, shape index: {}]
  %s2 = inlined_call_operand.vmem [shape: f32[1,64], index: 2, kind: input, shape index: {}]
  %s3 = inlined_call_operand.vmem [shape: bf16[3,80,128], index: 3, kind: input, shape index: {}]
  %s4 = inlined_call_operand.vmem [shape: f32[1,64], index: 4, kind: input, shape index: {}]
  %s5 = inlined_call_operand.vmem [shape: bf16[3,96,64], index: 5, kind: input, shape index: {}]
  %s6 = inlined_call_operand.hbm [shape: f32[1,32], index: 6, kind: input, shape index: {}]
  %s7 = inlined_call_operand.vmem [shape: bf16[2,32,128], index: 7, kind: input, shape index: {}]
  %s8 = inlined_call_operand.vmem [shape: f32[1,128], index: 8, kind: input, shape index: {}]
  %s9 = inlined_call_operand.hbm [shape: f32[2,128], index: 9, kind: output, shape index: {}]
  %s10 = sld [smem:[#allocation0]]
  $region54: #{tpu_custom_call.1} parent=0
    _
  %s12 = ssub.s32 1, %s10
  %s13 = scalar_select 0, %s12, %s10
  $region1: #{tpu_custom_call.1} parent=0
    #allocation5 [shape = 'u8[8192]{0}', space=vmem, size = 0x2000, scoped, tag = 'input window, operand 0, single buffered']
    #allocation6 [shape = 's32[1]{0}', space=sflag, size = 0x4, scoped, tag = 'scoped memory for tpu_custom_call.1']
    #allocation7 [shape = 's32[1]{0}', space=sflag, size = 0x4, scoped, tag = 'scoped memory for tpu_custom_call.1']
    #allocation8 [shape = 'u8[512]{0}', space=vmem, size = 0x400, scoped, tag = 'input window, operand 6, single buffered']
    #allocation9 [shape = 's32[1]{0}', space=sflag, size = 0x4, scoped, tag = 'scoped memory for tpu_custom_call.1']
    #allocation10 [shape = 'u8[1024]{0}', space=vmem, size = 0x400, scoped, tag = 'output window, operand 0, single buffered']
    %14 = vsyncpa [#allocation6], 0
    %15 = vsyncpa [#allocation9], 0
    %16 = vsyncpa [#allocation7], 0
    // Predicated region
    $region2: #{tpu_custom_call.1} parent=1 // pred_check
      _
    $region3: #{tpu_custom_call.1} parent=1 // pred_check_branch
      %18 = sbr.rel (0) target = $region5
    $region4: #{tpu_custom_call.1} parent=1 // pred_region
      %s20 = ssub.s32 256, 256
      %21 = vsyncadd [#allocation6], %s20
      %s22 = sshll.u32 [#allocation5], 4
      %s23 = int_to_ptr.vmem [resolvable:$true] %s22
      %28 = dma.hbm_to_vmem [thread:$0]  %s0, 256, %s23, [#allocation6], 16, 16, 1
    $region5: #{tpu_custom_call.1} parent=1 // pred_fallthru
      _
    // Predicated region
    $region6: #{tpu_custom_call.1} parent=1 // pred_check
      _
    $region7: #{tpu_custom_call.1} parent=1 // pred_check_branch
      %30 = sbr.rel (0) target = $region9
    $region8: #{tpu_custom_call.1} parent=1 // pred_region
      _
    $region9: #{tpu_custom_call.1} parent=1 // pred_fallthru
      _
    // Predicated region
    $region10: #{tpu_custom_call.1} parent=1 // pred_check
      _
    $region11: #{tpu_custom_call.1} parent=1 // pred_check_branch
      %32 = sbr.rel (0) target = $region13
    $region12: #{tpu_custom_call.1} parent=1 // pred_region
      _
    $region13: #{tpu_custom_call.1} parent=1 // pred_fallthru
      _
    // Predicated region
    $region14: #{tpu_custom_call.1} parent=1 // pred_check
      _
    $region15: #{tpu_custom_call.1} parent=1 // pred_check_branch
      %34 = sbr.rel (0) target = $region17
    $region16: #{tpu_custom_call.1} parent=1 // pred_region
      _
    $region17: #{tpu_custom_call.1} parent=1 // pred_fallthru
      _
    // Predicated region
    $region18: #{tpu_custom_call.1} parent=1 // pred_check
      _
    $region19: #{tpu_custom_call.1} parent=1 // pred_check_branch
      %36 = sbr.rel (0) target = $region21
    $region20: #{tpu_custom_call.1} parent=1 // pred_region
      _
    $region21: #{tpu_custom_call.1} parent=1 // pred_fallthru
      _
    // Predicated region
    $region22: #{tpu_custom_call.1} parent=1 // pred_check
      _
    $region23: #{tpu_custom_call.1} parent=1 // pred_check_branch
      %38 = sbr.rel (0) target = $region25
    $region24: #{tpu_custom_call.1} parent=1 // pred_region
      _
    $region25: #{tpu_custom_call.1} parent=1 // pred_fallthru
      _
    // Predicated region
    $region26: #{tpu_custom_call.1} parent=1 // pred_check
      _
    $region27: #{tpu_custom_call.1} parent=1 // pred_check_branch
      %40 = sbr.rel (0) target = $region29
    $region28: #{tpu_custom_call.1} parent=1 // pred_region
      %s42 = ssub.s32 16, 16
      %43 = vsyncadd [#allocation9], %s42
      %s45 = sshll.u32 [#allocation8], 4
      %s46 = int_to_ptr.vmem [resolvable:$true] %s45
      %48 = dma.hbm_to_vmem [thread:$0]  %s6, 16, %s46, [#allocation9]
    $region29: #{tpu_custom_call.1} parent=1 // pred_fallthru
      _
    // Predicated region
    $region30: #{tpu_custom_call.1} parent=1 // pred_check
      _
    $region31: #{tpu_custom_call.1} parent=1 // pred_check_branch
      %50 = sbr.rel (0) target = $region33
    $region32: #{tpu_custom_call.1} parent=1 // pred_region
      _
    $region33: #{tpu_custom_call.1} parent=1 // pred_fallthru
      _
    // Predicated region
    $region34: #{tpu_custom_call.1} parent=1 // pred_check
      _
    $region35: #{tpu_custom_call.1} parent=1 // pred_check_branch
      %52 = sbr.rel (0) target = $region37
    $region36: #{tpu_custom_call.1} parent=1 // pred_region
      _
    $region37: #{tpu_custom_call.1} parent=1 // pred_fallthru
      _
    // Predicated region
    $region38: #{tpu_custom_call.1} parent=1 // pred_check
      _
    $region39: #{tpu_custom_call.1} parent=1 // pred_check_branch
      %54 = sbr.rel (0) target = $region41
    $region40: #{tpu_custom_call.1} parent=1 // pred_region
      %55 = dma.done [#allocation6], 256
    $region41: #{tpu_custom_call.1} parent=1 // pred_fallthru
      _
    // Predicated region
    $region42: #{tpu_custom_call.1} parent=1 // pred_check
      _
    $region43: #{tpu_custom_call.1} parent=1 // pred_check_branch
      %57 = sbr.rel (0) target = $region45
    $region44: #{tpu_custom_call.1} parent=1 // pred_region
      %58 = dma.done [#allocation9], 16
    $region45: #{tpu_custom_call.1} parent=1 // pred_fallthru
      _
    %v60 = vld [vmem:[#allocation5] sm:$0x1]
    %v61 = vld [vmem:[#allocation5 + $0x1] sm:$0x1]
    %v62 = vld [vmem:[#allocation5 + $0x2] sm:$0x1]
    %v63 = vld [vmem:[#allocation5 + $0x3] sm:$0x1]
    %v64 = vld [vmem:[#allocation5 + $0x4] sm:$0x1]
    %v65 = vld [vmem:[#allocation5 + $0x5] sm:$0x1]
    %v66 = vld [vmem:[#allocation5 + $0x6] sm:$0x1]
    %v67 = vld [vmem:[#allocation5 + $0x7] sm:$0x1]
    %v68 = vld [vmem:[#allocation5 + $0x8] sm:$0x1]
    %v69 = vld [vmem:[#allocation5 + $0x9] sm:$0x1]
    %v70 = vld [vmem:[#allocation5 + $0xa] sm:$0x1]
    %v71 = vld [vmem:[#allocation5 + $0xb] sm:$0x1]
    %v72 = vld [vmem:[#allocation5 + $0xc] sm:$0x1]
    %v73 = vld [vmem:[#allocation5 + $0xd] sm:$0x1]
    %v74 = vld [vmem:[#allocation5 + $0xe] sm:$0x1]
    %v75 = vld [vmem:[#allocation5 + $0xf] sm:$0x1]
    %vm76 = vcmask 581632
    %77 = vst.msk [vmem:[#allocation2] sm:$0x1] %vm76, 0
    %vm78 = vcmask 582657
    %79 = vst.msk [vmem:[#allocation2 + $0x10] sm:$0x2] %vm78, 0
    %vm80 = vcmask 27648
    %81 = vst.msk [vmem:[#allocation2] sm:$0xf] %vm80, 0
    %82 = vst.msk [vmem:[#allocation2 + $0x4] sm:$0xf] %vm80, 0
    %83 = vst.msk [vmem:[#allocation2 + $0x8] sm:$0xf] %vm80, 0
    %84 = vst.msk [vmem:[#allocation2 + $0xc] sm:$0xf] %vm80, 0
    %vm85 = vcmask 25600
    %86 = vst.msk [vmem:[#allocation2 + $0x10] sm:$0x3] %vm85, 0
    %vm87 = vcmask 585248
    %88 = vst.msk [vmem:[#allocation2] sm:$0xf] %vm87, 0
    %89 = vst.msk [vmem:[#allocation2 + $0x4] sm:$0xf] %vm87, 0
    %90 = vst.msk [vmem:[#allocation2 + $0x8] sm:$0xf] %vm87, 0
    %91 = vst.msk [vmem:[#allocation2 + $0xc] sm:$0xf] %vm87, 0
    %vm92 = vcmask 583200
    %93 = vst.msk [vmem:[#allocation2 + $0x10] sm:$0x3] %vm92, 0
    %v110 = vcombine.low %v61, %v61
    %v111 = vcombine.low %v60, %v62
    %v113 = vunpack.c.l.s4 1935823168
    %v114 = vunpack.c.0.s8 %v113
    %v115 = vlaneseq
    %v116 = vshrl.u32 %v115, 7
    %v117 = vsub.s32 %v114, %v116
    %v118 = vrot.slane %v110, %v117
    %v120 = vunpack.c.l.s4 1935823168
    %v121 = vunpack.c.0.s8 %v120
    %v122 = vlaneseq
    %v123 = vshrl.u32 %v122, 7
    %v124 = vsub.s32 %v121, %v123
    %v125 = vrot.slane %v111, %v124
    %v126 = vcombine.low %v118, %v125
    %v128 = vunpack.c.l.s4 1935823168
    %v129 = vunpack.c.0.s8 %v128
    %v130 = vlaneseq
    %v131 = vshrl.u32 %v130, 7
    %v132 = vsub.s32 %v129, %v131
    %v133 = vrot.slane %v126, %v132
    %v134 = vcombine.low %v63, %v65
    %v135 = vcombine.low %v64, %v66
    %v137 = vunpack.c.l.s4 1935823168
    %v138 = vunpack.c.0.s8 %v137
    %v139 = vlaneseq
    %v140 = vshrl.u32 %v139, 7
    %v141 = vsub.s32 %v138, %v140
    %v142 = vrot.slane %v134, %v141
    %v144 = vunpack.c.l.s4 1935823168
    %v145 = vunpack.c.0.s8 %v144
    %v146 = vlaneseq
    %v147 = vshrl.u32 %v146, 7
    %v148 = vsub.s32 %v145, %v147
    %v149 = vrot.slane %v135, %v148
    %v150 = vcombine.low %v142, %v149
    %v152 = vunpack.c.l.s4 1935823168
    %v153 = vunpack.c.0.s8 %v152
    %v154 = vlaneseq
    %v155 = vshrl.u32 %v154, 7
    %v156 = vsub.s32 %v153, %v155
    %v157 = vrot.slane %v150, %v156
    %v158 = vcombine.low %v67, %v69
    %v159 = vcombine.low %v68, %v70
    %v161 = vunpack.c.l.s4 1935823168
    %v162 = vunpack.c.0.s8 %v161
    %v163 = vlaneseq
    %v164 = vshrl.u32 %v163, 7
    %v165 = vsub.s32 %v162, %v164
    %v166 = vrot.slane %v158, %v165
    %v168 = vunpack.c.l.s4 1935823168
    %v169 = vunpack.c.0.s8 %v168
    %v170 = vlaneseq
    %v171 = vshrl.u32 %v170, 7
    %v172 = vsub.s32 %v169, %v171
    %v173 = vrot.slane %v159, %v172
    %v174 = vcombine.low %v166, %v173
    %v176 = vunpack.c.l.s4 1935823168
    %v177 = vunpack.c.0.s8 %v176
    %v178 = vlaneseq
    %v179 = vshrl.u32 %v178, 7
    %v180 = vsub.s32 %v177, %v179
    %v181 = vrot.slane %v174, %v180
    %v182 = vcombine.low %v71, %v73
    %v183 = vcombine.low %v72, %v74
    %v185 = vunpack.c.l.s4 1935823168
    %v186 = vunpack.c.0.s8 %v185
    %v187 = vlaneseq
    %v188 = vshrl.u32 %v187, 7
    %v189 = vsub.s32 %v186, %v188
    %v190 = vrot.slane %v182, %v189
    %v192 = vunpack.c.l.s4 1935823168
    %v193 = vunpack.c.0.s8 %v192
    %v194 = vlaneseq
    %v195 = vshrl.u32 %v194, 7
    %v196 = vsub.s32 %v193, %v195
    %v197 = vrot.slane %v183, %v196
    %v198 = vcombine.low %v190, %v197
    %v200 = vunpack.c.l.s4 1935823168
    %v201 = vunpack.c.0.s8 %v200
    %v202 = vlaneseq
    %v203 = vshrl.u32 %v202, 7
    %v204 = vsub.s32 %v201, %v203
    %v205 = vrot.slane %v198, %v204
    %v207 = vunpack.c.l.s4 1935823168
    %v208 = vunpack.c.0.s8 %v207
    %v209 = vlaneseq
    %v210 = vshrl.u32 %v209, 7
    %v211 = vsub.s32 %v208, %v210
    %v212 = vrot.slane %v75, %v211
    %v214 = vunpack.c.l.s4 1935823168
    %v215 = vunpack.c.0.s8 %v214
    %v216 = vlaneseq
    %v217 = vshrl.u32 %v216, 7
    %v218 = vsub.s32 %v215, %v217
    %v219 = vrot.slane %v212, %v218
    %220 = vrot.lane.b32.xlu0 %v133, 4
    %v221 = vpop.permute.xlu0 %220
    %222 = vrot.lane.b32.xlu0 %v157, 4
    %v223 = vpop.permute.xlu0 %222
    %224 = vrot.lane.b32.xlu0 %v181, 4
    %v225 = vpop.permute.xlu0 %224
    %226 = vrot.lane.b32.xlu0 %v205, 4
    %v227 = vpop.permute.xlu0 %226
    %228 = vrot.lane.b32.xlu0 %v219, 4
    %v229 = vpop.permute.xlu0 %228
    %vm235 = vcmask 551969
    %236 = vst.msk [vmem:[#allocation2] sm:$0xe] %vm235, %v221
    %vm237 = vcmask 551968
    %238 = vst.msk [vmem:[#allocation2 + $0x4] sm:$0xf] %vm237, %v223
    %239 = vst.msk [vmem:[#allocation2 + $0x8] sm:$0xf] %vm237, %v225
    %240 = vst.msk [vmem:[#allocation2 + $0xc] sm:$0xf] %vm237, %v227
    %vm241 = vcmask 548896
    %242 = vst.msk [vmem:[#allocation2 + $0x10] sm:$0x1] %vm241, %v229
    %v243 = vld [vmem:[#allocation2] sm:$0xf]
    %v244 = vld [vmem:[#allocation2 + $0x4] sm:$0xf]
    %v245 = vld [vmem:[#allocation2 + $0x8] sm:$0xf]
    %v246 = vld [vmem:[#allocation2 + $0xc] sm:$0xf]
    %v247 = vld [vmem:[%s1] sm:$0xf]
    %v248 = vld [vmem:[%s1 + $0x4] sm:$0xf]
    %v249 = vld [vmem:[%s1 + $0x8] sm:$0xf]
    %v250 = vld [vmem:[%s1 + $0xc] sm:$0xf]
    %v251 = vld [vmem:[%s1 + $0x10] sm:$0xf]
    %v252 = vld [vmem:[%s1 + $0x14] sm:$0xf]
    %v253 = vld [vmem:[%s1 + $0x18] sm:$0xf]
    %v254 = vld [vmem:[%s1 + $0x1c] sm:$0xf]
    %v255 = vld [vmem:[%s1 + $0x20] sm:$0xf]
    %v256 = vld [vmem:[#allocation2] sm:$0xe]
    %v257 = vld [vmem:[#allocation2 + $0x10] sm:$0x1]
    %s258 = scalar_lea.vmem %s1, 36
    %v259 = vld [vmem:[%s258] sm:$0xf]
    %v260 = vld [vmem:[%s258 + $0x4] sm:$0xf]
    %v261 = vld [vmem:[%s258 + $0x8] sm:$0xf]
    %v262 = vld [vmem:[%s258 + $0xc] sm:$0xf]
    %v263 = vld [vmem:[%s258 + $0x10] sm:$0xf]
    %v264 = vld [vmem:[%s258 + $0x14] sm:$0xf]
    %v265 = vld [vmem:[%s258 + $0x18] sm:$0xf]
    %v266 = vld [vmem:[%s258 + $0x1c] sm:$0xf]
    %v267 = vld [vmem:[%s258 + $0x20] sm:$0xf]
    %v273 = vunpack.c.l.b16 %v256
    %v274 = vunpack.c.l.b16 %v244
    %v275 = vunpack.c.l.b16 %v245
    %v276 = vunpack.c.l.b16 %v246
    %v277 = vunpack.c.l.b16 %v257
    %v278 = vpack.c.b16 %v274, %v273
    %v279 = vpack.c.b16 %v276, %v275
    %v280 = vpack.c.b16 %v277, %v277
    %vm281 = vcmask 1046528
    %v282 = vrot.slane %v278, 1
    %v283 = vrot.slane %v279, 1
    %v284 = vsel %vm281, %v282, %v283
    %v285 = vrot.slane %v280, 1
    %v286 = vsel %vm281, %v283, %v285
    %v296 = vunpack.c.l.b16 %v259
    %v297 = vunpack.c.l.b16 %v260
    %v298 = vunpack.c.l.b16 %v261
    %v299 = vunpack.c.l.b16 %v262
    %v300 = vunpack.c.l.b16 %v263
    %v301 = vunpack.c.l.b16 %v264
    %v302 = vunpack.c.l.b16 %v265
    %v303 = vunpack.c.l.b16 %v266
    %v304 = vunpack.c.l.b16 %v267
    %v305 = vpack.c.b16 %v297, %v296
    %v306 = vpack.c.b16 %v299, %v298
    %v307 = vpack.c.b16 %v301, %v300
    %v308 = vpack.c.b16 %v303, %v302
    %v309 = vpack.c.b16 %v304, %v304
    %vm314 = vcmask 588800
    %v316 = vsel %vm314, %v284, 0
    %v319 = vsel %vm314, %v286, 0
    %vm321 = vcmask 1043456
    %v323 = vsel %vm321, %v309, 0
    %325 = vmatprep.subr.bf16.mxu0 0
    %326 = vmatpush1.bf16.msra.mxu0 %v305
    %327 = vmatprep.subr.bf16.mxu0 0
    %328 = vmatpush1.bf16.msra.mxu0 %v306
    %329 = vmatprep.subr.bf16.mxu0 0
    %330 = vmatpush1.bf16.msra.mxu0 %v307
    %331 = vmatprep.subr.bf16.mxu0 0
    %332 = vmatpush1.bf16.msra.mxu0 %v308
    %333 = vmatprep.subr.bf16.mxu0 0
    %334 = vmatpush1.bf16.msra.mxu0 %v323
    %335 = vmatprep.subr.bf16.mxu0 0
    %336 = vmatpush1.bf16.msra.mxu0 0
    %337 = vmatprep.subr.bf16.mxu0 0
    %338 = vmatpush1.bf16.msra.mxu0 0
    %339 = vmatprep.subr.bf16.mxu0 0
    %340 = vmatpush1.bf16.msra.mxu0 0
    %341 = vmatprep.subr.bf16.mxu0 0
    %342 = vmatpush1.bf16.msra.mxu0 0
    %343 = vmatprep.subr.bf16.mxu0 0
    %344 = vmatpush1.bf16.msra.mxu0 0
    %345 = vmatprep.subr.bf16.mxu0 0
    %346 = vmatpush1.bf16.msra.mxu0 0
    %347 = vmatprep.subr.bf16.mxu0 0
    %348 = vmatpush1.bf16.msra.mxu0 0
    %349 = vmatprep.subr.bf16.mxu0 0
    %350 = vmatpush1.bf16.msra.mxu0 0
    %351 = vmatprep.subr.bf16.mxu0 0
    %352 = vmatpush1.bf16.msra.mxu0 0
    %353 = vmatprep.subr.bf16.mxu0 0
    %354 = vmatpush1.bf16.msra.mxu0 0
    %355 = vmatprep.subr.bf16.mxu0 0
    %356 = vmatpush1.bf16.msra.mxu0 0
    %357 = vmatprep.mubr.bf16.mxu0 0
    %358 = vmatmul.mubr.bf16.gmra.mrb[0].mxu0 %v316
    %v359 = vpop.f32.mrb[0].mxu0
    %v360 = vadd.f32 0.0, %v359
    %v361 = vpop.f32.mrb[0].mxu0
    %v362 = vpop.f32.mrb[0].mxu0
    %v363 = vadd.f32 0.0, %v362
    %v364 = vpop.f32.mrb[0].mxu0
    %365 = vmatprep.mubr.bf16.mxu0 0
    %366 = vmatmul.mubr.bf16.gmra.mrb[0].mxu0 %v319
    %v367 = vpop.f32.mrb[0].mxu0
    %v368 = vadd.f32 0.0, %v367
    %v369 = vpop.f32.mrb[0].mxu0
    %v370 = vpop.f32.mrb[0].mxu0
    %v371 = vadd.f32 0.0, %v370
    %v372 = vpop.f32.mrb[0].mxu0
    %373 = vdwg.mxu0
    %v375 = vunpack.c.l.b16 %v243
    %v376 = vpack.c.b16 %v274, %v375
    %v386 = vunpack.c.l.b16 %v247
    %v387 = vunpack.c.l.b16 %v248
    %v388 = vunpack.c.l.b16 %v249
    %v389 = vunpack.c.l.b16 %v250
    %v390 = vunpack.c.l.b16 %v251
    %v391 = vunpack.c.l.b16 %v252
    %v392 = vunpack.c.l.b16 %v253
    %v393 = vunpack.c.l.b16 %v254
    %v394 = vunpack.c.l.b16 %v255
    %v395 = vpack.c.b16 %v387, %v386
    %v396 = vpack.c.b16 %v389, %v388
    %v397 = vpack.c.b16 %v391, %v390
    %v398 = vpack.c.b16 %v393, %v392
    %v399 = vpack.c.b16 %v394, %v394
    %v405 = vsel %vm314, %v376, 0
    %v408 = vsel %vm314, %v279, 0
    %v411 = vsel %vm321, %v399, 0
    %413 = vmatprep.subr.bf16.mxu0 0
    %414 = vmatpush1.bf16.msra.mxu0 %v395
    %415 = vmatprep.subr.bf16.mxu0 0
    %416 = vmatpush1.bf16.msra.mxu0 %v396
    %417 = vmatprep.subr.bf16.mxu0 0
    %418 = vmatpush1.bf16.msra.mxu0 %v397
    %419 = vmatprep.subr.bf16.mxu0 0
    %420 = vmatpush1.bf16.msra.mxu0 %v398
    %421 = vmatprep.subr.bf16.mxu0 0
    %422 = vmatpush1.bf16.msra.mxu0 %v411
    %423 = vmatprep.subr.bf16.mxu0 0
    %424 = vmatpush1.bf16.msra.mxu0 0
    %425 = vmatprep.subr.bf16.mxu0 0
    %426 = vmatpush1.bf16.msra.mxu0 0
    %427 = vmatprep.subr.bf16.mxu0 0
    %428 = vmatpush1.bf16.msra.mxu0 0
    %429 = vmatprep.subr.bf16.mxu0 0
    %430 = vmatpush1.bf16.msra.mxu0 0
    %431 = vmatprep.subr.bf16.mxu0 0
    %432 = vmatpush1.bf16.msra.mxu0 0
    %433 = vmatprep.subr.bf16.mxu0 0
    %434 = vmatpush1.bf16.msra.mxu0 0
    %435 = vmatprep.subr.bf16.mxu0 0
    %436 = vmatpush1.bf16.msra.mxu0 0
    %437 = vmatprep.subr.bf16.mxu0 0
    %438 = vmatpush1.bf16.msra.mxu0 0
    %439 = vmatprep.subr.bf16.mxu0 0
    %440 = vmatpush1.bf16.msra.mxu0 0
    %441 = vmatprep.subr.bf16.mxu0 0
    %442 = vmatpush1.bf16.msra.mxu0 0
    %443 = vmatprep.subr.bf16.mxu0 0
    %444 = vmatpush1.bf16.msra.mxu0 0
    %445 = vmatprep.mubr.bf16.mxu0 0
    %446 = vmatmul.mubr.bf16.gmra.mrb[0].mxu0 %v405
    %v447 = vpop.f32.mrb[0].mxu0
    %v448 = vadd.f32 %v360, %v447
    %v449 = vpop.f32.mrb[0].mxu0
    %v450 = vpop.f32.mrb[0].mxu0
    %v451 = vadd.f32 %v363, %v450
    %v452 = vpop.f32.mrb[0].mxu0
    %453 = vmatprep.mubr.bf16.mxu0 0
    %454 = vmatmul.mubr.bf16.gmra.mrb[0].mxu0 %v408
    %v455 = vpop.f32.mrb[0].mxu0
    %v456 = vadd.f32 %v368, %v455
    %v457 = vpop.f32.mrb[0].mxu0
    %v458 = vpop.f32.mrb[0].mxu0
    %v459 = vadd.f32 %v371, %v458
    %v460 = vpop.f32.mrb[0].mxu0
    %461 = vdwg.mxu0
    %v462 = vld [vmem:[#allocation2] sm:$0xc]
    %v463 = vld [vmem:[#allocation2 + $0x10] sm:$0x3]
    %s464 = scalar_lea.vmem %s1, 72
    %v465 = vld [vmem:[%s464] sm:$0xf]
    %v466 = vld [vmem:[%s464 + $0x4] sm:$0xf]
    %v467 = vld [vmem:[%s464 + $0x8] sm:$0xf]
    %v468 = vld [vmem:[%s464 + $0xc] sm:$0xf]
    %v469 = vld [vmem:[%s464 + $0x10] sm:$0xf]
    %v470 = vld [vmem:[%s464 + $0x14] sm:$0xf]
    %v471 = vld [vmem:[%s464 + $0x18] sm:$0xf]
    %v472 = vld [vmem:[%s464 + $0x1c] sm:$0xf]
    %v473 = vld [vmem:[%s464 + $0x20] sm:$0xf]
    %v476 = vunpack.c.l.b16 %v462
    %v477 = vunpack.c.l.b16 %v463
    %v478 = vpack.c.b16 %v274, %v476
    %v479 = vpack.c.b16 %v477, %v477
    %vm480 = vcmask 1045504
    %v481 = vrot.slane %v478, 2
    %v482 = vrot.slane %v279, 2
    %v483 = vsel %vm480, %v481, %v482
    %v484 = vrot.slane %v479, 2
    %v485 = vsel %vm480, %v482, %v484
    %v495 = vunpack.c.l.b16 %v465
    %v496 = vunpack.c.l.b16 %v466
    %v497 = vunpack.c.l.b16 %v467
    %v498 = vunpack.c.l.b16 %v468
    %v499 = vunpack.c.l.b16 %v469
    %v500 = vunpack.c.l.b16 %v470
    %v501 = vunpack.c.l.b16 %v471
    %v502 = vunpack.c.l.b16 %v472
    %v503 = vunpack.c.l.b16 %v473
    %v504 = vpack.c.b16 %v496, %v495
    %v505 = vpack.c.b16 %v498, %v497
    %v506 = vpack.c.b16 %v500, %v499
    %v507 = vpack.c.b16 %v502, %v501
    %v508 = vpack.c.b16 %v503, %v503
    %v514 = vsel %vm314, %v483, 0
    %v517 = vsel %vm314, %v485, 0
    %v520 = vsel %vm321, %v508, 0
    %522 = vmatprep.subr.bf16.mxu0 0
    %523 = vmatpush1.bf16.msra.mxu0 %v504
    %524 = vmatprep.subr.bf16.mxu0 0
    %525 = vmatpush1.bf16.msra.mxu0 %v505
    %526 = vmatprep.subr.bf16.mxu0 0
    %527 = vmatpush1.bf16.msra.mxu0 %v506
    %528 = vmatprep.subr.bf16.mxu0 0
    %529 = vmatpush1.bf16.msra.mxu0 %v507
    %530 = vmatprep.subr.bf16.mxu0 0
    %531 = vmatpush1.bf16.msra.mxu0 %v520
    %532 = vmatprep.subr.bf16.mxu0 0
    %533 = vmatpush1.bf16.msra.mxu0 0
    %534 = vmatprep.subr.bf16.mxu0 0
    %535 = vmatpush1.bf16.msra.mxu0 0
    %536 = vmatprep.subr.bf16.mxu0 0
    %537 = vmatpush1.bf16.msra.mxu0 0
    %538 = vmatprep.subr.bf16.mxu0 0
    %539 = vmatpush1.bf16.msra.mxu0 0
    %540 = vmatprep.subr.bf16.mxu0 0
    %541 = vmatpush1.bf16.msra.mxu0 0
    %542 = vmatprep.subr.bf16.mxu0 0
    %543 = vmatpush1.bf16.msra.mxu0 0
    %544 = vmatprep.subr.bf16.mxu0 0
    %545 = vmatpush1.bf16.msra.mxu0 0
    %546 = vmatprep.subr.bf16.mxu0 0
    %547 = vmatpush1.bf16.msra.mxu0 0
    %548 = vmatprep.subr.bf16.mxu0 0
    %549 = vmatpush1.bf16.msra.mxu0 0
    %550 = vmatprep.subr.bf16.mxu0 0
    %551 = vmatpush1.bf16.msra.mxu0 0
    %552 = vmatprep.subr.bf16.mxu0 0
    %553 = vmatpush1.bf16.msra.mxu0 0
    %554 = vmatprep.mubr.bf16.mxu0 0
    %555 = vmatmul.mubr.bf16.gmra.mrb[0].mxu0 %v514
    %v556 = vpop.f32.mrb[0].mxu0
    %v557 = vadd.f32 0.0, %v556
    %v558 = vpop.f32.mrb[0].mxu0
    %v559 = vpop.f32.mrb[0].mxu0
    %v560 = vadd.f32 0.0, %v559
    %v561 = vpop.f32.mrb[0].mxu0
    %562 = vmatprep.mubr.bf16.mxu0 0
    %563 = vmatmul.mubr.bf16.gmra.mrb[0].mxu0 %v517
    %v564 = vpop.f32.mrb[0].mxu0
    %v565 = vadd.f32 0.0, %v564
    %v566 = vpop.f32.mrb[0].mxu0
    %v567 = vpop.f32.mrb[0].mxu0
    %v568 = vadd.f32 0.0, %v567
    %v569 = vpop.f32.mrb[0].mxu0
    %570 = vdwg.mxu0
    %v571 = vadd.f32 %v448, %v557
    %v572 = vadd.f32 %v451, %v560
    %v573 = vadd.f32 %v456, %v565
    %v574 = vadd.f32 %v459, %v568
    %579 = vrot.lane.b32.xlu0 %v571, 64
    %v580 = vpop.permute.xlu0 %579
    %581 = vrot.lane.b32.xlu0 %v572, 64
    %v582 = vpop.permute.xlu0 %581
    %583 = vrot.lane.b32.xlu0 %v573, 64
    %v584 = vpop.permute.xlu0 %583
    %585 = vrot.lane.b32.xlu0 %v574, 64
    %v586 = vpop.permute.xlu0 %585
    %v591 = vmax.f32 %v571, %v580
    %v592 = vmax.f32 %v572, %v582
    %v593 = vmax.f32 %v573, %v584
    %v594 = vmax.f32 %v574, %v586
    %v599 = vcombine.high %v591, %v591
    %v600 = vcombine.high %v592, %v592
    %v601 = vcombine.high %v593, %v593
    %v602 = vcombine.high %v594, %v594
    %v607 = vrot.slane %v591, 6
    %v608 = vrot.slane %v607, 4
    %v609 = vrot.slane %v599, 6
    %v610 = vrot.slane %v609, 4
    %v611 = vrot.slane %v592, 6
    %v612 = vrot.slane %v611, 4
    %v613 = vrot.slane %v600, 6
    %v614 = vrot.slane %v613, 4
    %v615 = vrot.slane %v593, 6
    %v616 = vrot.slane %v615, 4
    %v617 = vrot.slane %v601, 6
    %v618 = vrot.slane %v617, 4
    %v619 = vrot.slane %v594, 6
    %v620 = vrot.slane %v619, 4
    %v621 = vrot.slane %v602, 6
    %v622 = vrot.slane %v621, 4
    %v631 = vmax.f32 %v591, %v608
    %v632 = vmax.f32 %v599, %v610
    %v633 = vmax.f32 %v592, %v612
    %v634 = vmax.f32 %v600, %v614
    %v635 = vmax.f32 %v593, %v616
    %v636 = vmax.f32 %v601, %v618
    %v637 = vmax.f32 %v594, %v620
    %v638 = vmax.f32 %v602, %v622
    %v639 = vld [vmem:[%s2] sm:$0x1]
    %v641 = vlaneseq
    %v642 = vshrl.u32 %v641, 7
    %v643 = vsub.s32 0, %v642
    %v644 = vrot.slane %v639, %v643
    %v645 = vcombine.high %v644, %v644
    %v647 = vunpack.c.l.s4 1983009808
    %v648 = vunpack.c.0.s8 %v647
    %v649 = vlaneseq
    %v650 = vshrl.u32 %v649, 7
    %v651 = vsub.s32 %v648, %v650
    %v652 = vrot.slane %v644, %v651
    %v654 = vunpack.c.l.s4 1983009808
    %v655 = vunpack.c.0.s8 %v654
    %v656 = vlaneseq
    %v657 = vshrl.u32 %v656, 7
    %v658 = vsub.s32 %v655, %v657
    %v659 = vrot.slane %v645, %v658
    %v660 = vcombine.high %v652, %v652
    %v661 = vcombine.high %v659, %v659
    %v666 = vadd.f32 %v631, %v652
    %v667 = vadd.f32 %v632, %v660
    %v668 = vadd.f32 %v633, %v659
    %v669 = vadd.f32 %v634, %v661
    %v670 = vadd.f32 %v635, %v652
    %v671 = vadd.f32 %v636, %v660
    %v672 = vadd.f32 %v637, %v659
    %v673 = vadd.f32 %v638, %v661
    %v674 = vmax.f32 %v666, 0.0
    %v675 = vmax.f32 %v667, 0.0
    %v676 = vmax.f32 %v668, 0.0
    %v677 = vmax.f32 %v669, 0.0
    %v678 = vmax.f32 %v670, 0.0
    %v679 = vmax.f32 %v671, 0.0
    %v680 = vmax.f32 %v672, 0.0
    %v681 = vmax.f32 %v673, 0.0
    %v690 = vcombine.low %v674, %v675
    %v691 = vcombine.low %v676, %v677
    %v693 = vunpack.c.l.s4 1983009808
    %v694 = vunpack.c.0.s8 %v693
    %v695 = vlaneseq
    %v696 = vshrl.u32 %v695, 7
    %v697 = vsub.s32 %v694, %v696
    %v698 = vrot.slane %v690, %v697
    %v700 = vunpack.c.l.s4 1983009808
    %v701 = vunpack.c.0.s8 %v700
    %v702 = vlaneseq
    %v703 = vshrl.u32 %v702, 7
    %v704 = vsub.s32 %v701, %v703
    %v705 = vrot.slane %v691, %v704
    %v706 = vcombine.low %v698, %v705
    %v707 = vcombine.low %v678, %v679
    %v708 = vcombine.low %v680, %v681
    %v710 = vunpack.c.l.s4 1983009808
    %v711 = vunpack.c.0.s8 %v710
    %v712 = vlaneseq
    %v713 = vshrl.u32 %v712, 7
    %v714 = vsub.s32 %v711, %v713
    %v715 = vrot.slane %v707, %v714
    %v717 = vunpack.c.l.s4 1983009808
    %v718 = vunpack.c.0.s8 %v717
    %v719 = vlaneseq
    %v720 = vshrl.u32 %v719, 7
    %v721 = vsub.s32 %v718, %v720
    %v722 = vrot.slane %v708, %v721
    %v723 = vcombine.low %v715, %v722
    %v726 = vpack.c.bf16 %v723, %v706
    %vm727 = vcmask 647168
    %728 = vst.msk [vmem:[#allocation3] sm:$0x1] %vm727, 0
    %vm729 = vcmask 648193
    %730 = vst.msk [vmem:[#allocation3 + $0x8] sm:$0x2] %vm729, 0
    %vm731 = vcmask 60416
    %732 = vst.msk [vmem:[#allocation3] sm:$0xf] %vm731, 0
    %733 = vst.msk [vmem:[#allocation3 + $0x4] sm:$0xf] %vm731, 0
    %vm734 = vcmask 58368
    %735 = vst.msk [vmem:[#allocation3 + $0x8] sm:$0x3] %vm734, 0
    %vm736 = vcmask 650816
    %737 = vst.msk [vmem:[#allocation3] sm:$0xf] %vm736, 0
    %738 = vst.msk [vmem:[#allocation3 + $0x4] sm:$0xf] %vm736, 0
    %vm739 = vcmask 648768
    %740 = vst.msk [vmem:[#allocation3 + $0x8] sm:$0x3] %vm739, 0
    %v742 = vunpack.c.l.b16 %v726
    %v743 = vunpack.c.h.b16 %v726
    %v744 = vpack.c.b16 %v742, %v742
    %v745 = vpack.c.b16 %v743, %v743
    %vm746 = vcmask 1040384
    %vm747 = vcmask 1044484
    %vm748 = vmor %vm746, %vm747
    %v749 = vrot.slane %v744, 7
    %v750 = vrot.slane %v749, 4
    %v751 = vrot.slane %v745, 7
    %v752 = vsel %vm748, %v750, %v751
    %v753 = vrot.slane %v751, 4
    %754 = vrot.lane.b32.xlu0 %v749, 8
    %v755 = vpop.permute.xlu0 %754
    %756 = vrot.lane.b32.xlu0 %v752, 8
    %v757 = vpop.permute.xlu0 %756
    %758 = vrot.lane.b32.xlu0 %v753, 8
    %v759 = vpop.permute.xlu0 %758
    %vm763 = vcmask 584769
    %764 = vst.msk [vmem:[#allocation3] sm:$0xe] %vm763, %v755
    %vm765 = vcmask 584768
    %766 = vst.msk [vmem:[#allocation3 + $0x4] sm:$0xf] %vm765, %v757
    %vm767 = vcmask 581696
    %768 = vst.msk [vmem:[#allocation3 + $0x8] sm:$0x1] %vm767, %v759
    %v769 = vld [vmem:[#allocation3] sm:$0xf]
    %v770 = vld [vmem:[#allocation3 + $0x4] sm:$0xf]
    %v771 = vld [vmem:[%s3] sm:$0xf]
    %v772 = vld [vmem:[%s3 + $0x4] sm:$0xf]
    %v773 = vld [vmem:[%s3 + $0x8] sm:$0xf]
    %v774 = vld [vmem:[%s3 + $0xc] sm:$0xf]
    %v775 = vld [vmem:[%s3 + $0x10] sm:$0xf]
    %v776 = vld [vmem:[%s3 + $0x14] sm:$0xf]
    %v777 = vld [vmem:[%s3 + $0x18] sm:$0xf]
    %v778 = vld [vmem:[%s3 + $0x1c] sm:$0xf]
    %v779 = vld [vmem:[%s3 + $0x20] sm:$0xf]
    %v780 = vld [vmem:[%s3 + $0x24] sm:$0xf]
    %v781 = vld [vmem:[#allocation3] sm:$0xe]
    %v782 = vld [vmem:[#allocation3 + $0x8] sm:$0x1]
    %s783 = scalar_lea.vmem %s3, 40
    %v784 = vld [vmem:[%s783] sm:$0xf]
    %v785 = vld [vmem:[%s783 + $0x4] sm:$0xf]
    %v786 = vld [vmem:[%s783 + $0x8] sm:$0xf]
    %v787 = vld [vmem:[%s783 + $0xc] sm:$0xf]
    %v788 = vld [vmem:[%s783 + $0x10] sm:$0xf]
    %v789 = vld [vmem:[%s783 + $0x14] sm:$0xf]
    %v790 = vld [vmem:[%s783 + $0x18] sm:$0xf]
    %v791 = vld [vmem:[%s783 + $0x1c] sm:$0xf]
    %v792 = vld [vmem:[%s783 + $0x20] sm:$0xf]
    %v793 = vld [vmem:[%s783 + $0x24] sm:$0xf]
    %v797 = vunpack.c.l.b16 %v781
    %v798 = vunpack.c.l.b16 %v770
    %v799 = vunpack.c.l.b16 %v782
    %v800 = vpack.c.b16 %v798, %v797
    %v801 = vpack.c.b16 %v799, %v799
    %v802 = vrot.slane %v800, 1
    %v803 = vrot.slane %v801, 1
    %v804 = vsel %vm281, %v802, %v803
    %v815 = vunpack.c.l.b16 %v784
    %v816 = vunpack.c.l.b16 %v785
    %v817 = vunpack.c.l.b16 %v786
    %v818 = vunpack.c.l.b16 %v787
    %v819 = vunpack.c.l.b16 %v788
    %v820 = vunpack.c.l.b16 %v789
    %v821 = vunpack.c.l.b16 %v790
    %v822 = vunpack.c.l.b16 %v791
    %v823 = vunpack.c.l.b16 %v792
    %v824 = vunpack.c.l.b16 %v793
    %v825 = vpack.c.b16 %v816, %v815
    %v826 = vpack.c.b16 %v818, %v817
    %v827 = vpack.c.b16 %v820, %v819
    %v828 = vpack.c.b16 %v822, %v821
    %v829 = vpack.c.b16 %v824, %v823
    %vm835 = vcmask 654336
    %v837 = vsel %vm835, %v804, 0
    %839 = vmatprep.subr.bf16.mxu0 0
    %840 = vmatpush1.bf16.msra.mxu0 %v825
    %841 = vmatprep.subr.bf16.mxu0 0
    %842 = vmatpush1.bf16.msra.mxu0 %v826
    %843 = vmatprep.subr.bf16.mxu0 0
    %844 = vmatpush1.bf16.msra.mxu0 %v827
    %845 = vmatprep.subr.bf16.mxu0 0
    %846 = vmatpush1.bf16.msra.mxu0 %v828
    %847 = vmatprep.subr.bf16.mxu0 0
    %848 = vmatpush1.bf16.msra.mxu0 %v829
    %849 = vmatprep.subr.bf16.mxu0 0
    %850 = vmatpush1.bf16.msra.mxu0 0
    %851 = vmatprep.subr.bf16.mxu0 0
    %852 = vmatpush1.bf16.msra.mxu0 0
    %853 = vmatprep.subr.bf16.mxu0 0
    %854 = vmatpush1.bf16.msra.mxu0 0
    %855 = vmatprep.subr.bf16.mxu0 0
    %856 = vmatpush1.bf16.msra.mxu0 0
    %857 = vmatprep.subr.bf16.mxu0 0
    %858 = vmatpush1.bf16.msra.mxu0 0
    %859 = vmatprep.subr.bf16.mxu0 0
    %860 = vmatpush1.bf16.msra.mxu0 0
    %861 = vmatprep.subr.bf16.mxu0 0
    %862 = vmatpush1.bf16.msra.mxu0 0
    %863 = vmatprep.subr.bf16.mxu0 0
    %864 = vmatpush1.bf16.msra.mxu0 0
    %865 = vmatprep.subr.bf16.mxu0 0
    %866 = vmatpush1.bf16.msra.mxu0 0
    %867 = vmatprep.subr.bf16.mxu0 0
    %868 = vmatpush1.bf16.msra.mxu0 0
    %869 = vmatprep.subr.bf16.mxu0 0
    %870 = vmatpush1.bf16.msra.mxu0 0
    %871 = vmatprep.mubr.bf16.mxu0 0
    %872 = vmatmul.mubr.bf16.gmra.mrb[0].mxu0 %v837
    %v873 = vpop.f32.mrb[0].mxu0
    %v874 = vadd.f32 0.0, %v873
    %v875 = vpop.f32.mrb[0].mxu0
    %v876 = vpop.f32.mrb[0].mxu0
    %v877 = vadd.f32 0.0, %v876
    %v878 = vpop.f32.mrb[0].mxu0
    %879 = vdwg.mxu0
    %v881 = vunpack.c.l.b16 %v769
    %v882 = vpack.c.b16 %v798, %v881
    %v893 = vunpack.c.l.b16 %v771
    %v894 = vunpack.c.l.b16 %v772
    %v895 = vunpack.c.l.b16 %v773
    %v896 = vunpack.c.l.b16 %v774
    %v897 = vunpack.c.l.b16 %v775
    %v898 = vunpack.c.l.b16 %v776
    %v899 = vunpack.c.l.b16 %v777
    %v900 = vunpack.c.l.b16 %v778
    %v901 = vunpack.c.l.b16 %v779
    %v902 = vunpack.c.l.b16 %v780
    %v903 = vpack.c.b16 %v894, %v893
    %v904 = vpack.c.b16 %v896, %v895
    %v905 = vpack.c.b16 %v898, %v897
    %v906 = vpack.c.b16 %v900, %v899
    %v907 = vpack.c.b16 %v902, %v901
    %v914 = vsel %vm835, %v882, 0
    %916 = vmatprep.subr.bf16.mxu0 0
    %917 = vmatpush1.bf16.msra.mxu0 %v903
    %918 = vmatprep.subr.bf16.mxu0 0
    %919 = vmatpush1.bf16.msra.mxu0 %v904
    %920 = vmatprep.subr.bf16.mxu0 0
    %921 = vmatpush1.bf16.msra.mxu0 %v905
    %922 = vmatprep.subr.bf16.mxu0 0
    %923 = vmatpush1.bf16.msra.mxu0 %v906
    %924 = vmatprep.subr.bf16.mxu0 0
    %925 = vmatpush1.bf16.msra.mxu0 %v907
    %926 = vmatprep.subr.bf16.mxu0 0
    %927 = vmatpush1.bf16.msra.mxu0 0
    %928 = vmatprep.subr.bf16.mxu0 0
    %929 = vmatpush1.bf16.msra.mxu0 0
    %930 = vmatprep.subr.bf16.mxu0 0
    %931 = vmatpush1.bf16.msra.mxu0 0
    %932 = vmatprep.subr.bf16.mxu0 0
    %933 = vmatpush1.bf16.msra.mxu0 0
    %934 = vmatprep.subr.bf16.mxu0 0
    %935 = vmatpush1.bf16.msra.mxu0 0
    %936 = vmatprep.subr.bf16.mxu0 0
    %937 = vmatpush1.bf16.msra.mxu0 0
    %938 = vmatprep.subr.bf16.mxu0 0
    %939 = vmatpush1.bf16.msra.mxu0 0
    %940 = vmatprep.subr.bf16.mxu0 0
    %941 = vmatpush1.bf16.msra.mxu0 0
    %942 = vmatprep.subr.bf16.mxu0 0
    %943 = vmatpush1.bf16.msra.mxu0 0
    %944 = vmatprep.subr.bf16.mxu0 0
    %945 = vmatpush1.bf16.msra.mxu0 0
    %946 = vmatprep.subr.bf16.mxu0 0
    %947 = vmatpush1.bf16.msra.mxu0 0
    %948 = vmatprep.mubr.bf16.mxu0 0
    %949 = vmatmul.mubr.bf16.gmra.mrb[0].mxu0 %v914
    %v950 = vpop.f32.mrb[0].mxu0
    %v951 = vadd.f32 %v874, %v950
    %v952 = vpop.f32.mrb[0].mxu0
    %v953 = vpop.f32.mrb[0].mxu0
    %v954 = vadd.f32 %v877, %v953
    %v955 = vpop.f32.mrb[0].mxu0
    %956 = vdwg.mxu0
    %v957 = vld [vmem:[#allocation3] sm:$0xc]
    %v958 = vld [vmem:[#allocation3 + $0x8] sm:$0x3]
    %s959 = scalar_lea.vmem %s3, 80
    %v960 = vld [vmem:[%s959] sm:$0xf]
    %v961 = vld [vmem:[%s959 + $0x4] sm:$0xf]
    %v962 = vld [vmem:[%s959 + $0x8] sm:$0xf]
    %v963 = vld [vmem:[%s959 + $0xc] sm:$0xf]
    %v964 = vld [vmem:[%s959 + $0x10] sm:$0xf]
    %v965 = vld [vmem:[%s959 + $0x14] sm:$0xf]
    %v966 = vld [vmem:[%s959 + $0x18] sm:$0xf]
    %v967 = vld [vmem:[%s959 + $0x1c] sm:$0xf]
    %v968 = vld [vmem:[%s959 + $0x20] sm:$0xf]
    %v969 = vld [vmem:[%s959 + $0x24] sm:$0xf]
    %v972 = vunpack.c.l.b16 %v957
    %v973 = vunpack.c.l.b16 %v958
    %v974 = vpack.c.b16 %v798, %v972
    %v975 = vpack.c.b16 %v973, %v973
    %v976 = vrot.slane %v974, 2
    %v977 = vrot.slane %v975, 2
    %v978 = vsel %vm480, %v976, %v977
    %v989 = vunpack.c.l.b16 %v960
    %v990 = vunpack.c.l.b16 %v961
    %v991 = vunpack.c.l.b16 %v962
    %v992 = vunpack.c.l.b16 %v963
    %v993 = vunpack.c.l.b16 %v964
    %v994 = vunpack.c.l.b16 %v965
    %v995 = vunpack.c.l.b16 %v966
    %v996 = vunpack.c.l.b16 %v967
    %v997 = vunpack.c.l.b16 %v968
    %v998 = vunpack.c.l.b16 %v969
    %v999 = vpack.c.b16 %v990, %v989
    %v1000 = vpack.c.b16 %v992, %v991
    %v1001 = vpack.c.b16 %v994, %v993
    %v1002 = vpack.c.b16 %v996, %v995
    %v1003 = vpack.c.b16 %v998, %v997
    %v1010 = vsel %vm835, %v978, 0
    %1012 = vmatprep.subr.bf16.mxu0 0
    %1013 = vmatpush1.bf16.msra.mxu0 %v999
    %1014 = vmatprep.subr.bf16.mxu0 0
    %1015 = vmatpush1.bf16.msra.mxu0 %v1000
    %1016 = vmatprep.subr.bf16.mxu0 0
    %1017 = vmatpush1.bf16.msra.mxu0 %v1001
    %1018 = vmatprep.subr.bf16.mxu0 0
    %1019 = vmatpush1.bf16.msra.mxu0 %v1002
    %1020 = vmatprep.subr.bf16.mxu0 0
    %1021 = vmatpush1.bf16.msra.mxu0 %v1003
    %1022 = vmatprep.subr.bf16.mxu0 0
    %1023 = vmatpush1.bf16.msra.mxu0 0
    %1024 = vmatprep.subr.bf16.mxu0 0
    %1025 = vmatpush1.bf16.msra.mxu0 0
    %1026 = vmatprep.subr.bf16.mxu0 0
    %1027 = vmatpush1.bf16.msra.mxu0 0
    %1028 = vmatprep.subr.bf16.mxu0 0
    %1029 = vmatpush1.bf16.msra.mxu0 0
    %1030 = vmatprep.subr.bf16.mxu0 0
    %1031 = vmatpush1.bf16.msra.mxu0 0
    %1032 = vmatprep.subr.bf16.mxu0 0
    %1033 = vmatpush1.bf16.msra.mxu0 0
    %1034 = vmatprep.subr.bf16.mxu0 0
    %1035 = vmatpush1.bf16.msra.mxu0 0
    %1036 = vmatprep.subr.bf16.mxu0 0
    %1037 = vmatpush1.bf16.msra.mxu0 0
    %1038 = vmatprep.subr.bf16.mxu0 0
    %1039 = vmatpush1.bf16.msra.mxu0 0
    %1040 = vmatprep.subr.bf16.mxu0 0
    %1041 = vmatpush1.bf16.msra.mxu0 0
    %1042 = vmatprep.subr.bf16.mxu0 0
    %1043 = vmatpush1.bf16.msra.mxu0 0
    %1044 = vmatprep.mubr.bf16.mxu0 0
    %1045 = vmatmul.mubr.bf16.gmra.mrb[0].mxu0 %v1010
    %v1046 = vpop.f32.mrb[0].mxu0
    %v1047 = vadd.f32 0.0, %v1046
    %v1048 = vpop.f32.mrb[0].mxu0
    %v1049 = vpop.f32.mrb[0].mxu0
    %v1050 = vadd.f32 0.0, %v1049
    %v1051 = vpop.f32.mrb[0].mxu0
    %1052 = vdwg.mxu0
    %v1053 = vadd.f32 %v951, %v1047
    %v1054 = vadd.f32 %v954, %v1050
    %1057 = vrot.lane.b32.xlu0 %v1053, 64
    %v1058 = vpop.permute.xlu0 %1057
    %1059 = vrot.lane.b32.xlu0 %v1054, 64
    %v1060 = vpop.permute.xlu0 %1059
    %v1063 = vmax.f32 %v1053, %v1058
    %v1064 = vmax.f32 %v1054, %v1060
    %v1067 = vcombine.high %v1063, %v1063
    %v1068 = vcombine.high %v1064, %v1064
    %v1071 = vrot.slane %v1063, 6
    %v1072 = vrot.slane %v1071, 4
    %v1073 = vrot.slane %v1067, 6
    %v1074 = vrot.slane %v1073, 4
    %v1075 = vrot.slane %v1064, 6
    %v1076 = vrot.slane %v1075, 4
    %v1077 = vrot.slane %v1068, 6
    %v1078 = vrot.slane %v1077, 4
    %v1083 = vmax.f32 %v1063, %v1072
    %v1084 = vmax.f32 %v1067, %v1074
    %v1085 = vmax.f32 %v1064, %v1076
    %v1086 = vmax.f32 %v1068, %v1078
    %v1087 = vld [vmem:[%s4] sm:$0x1]
    %v1089 = vlaneseq
    %v1090 = vshrl.u32 %v1089, 7
    %v1091 = vsub.s32 0, %v1090
    %v1092 = vrot.slane %v1087, %v1091
    %v1093 = vcombine.high %v1092, %v1092
    %v1095 = vunpack.c.l.s4 1983009808
    %v1096 = vunpack.c.0.s8 %v1095
    %v1097 = vlaneseq
    %v1098 = vshrl.u32 %v1097, 7
    %v1099 = vsub.s32 %v1096, %v1098
    %v1100 = vrot.slane %v1092, %v1099
    %v1102 = vunpack.c.l.s4 1983009808
    %v1103 = vunpack.c.0.s8 %v1102
    %v1104 = vlaneseq
    %v1105 = vshrl.u32 %v1104, 7
    %v1106 = vsub.s32 %v1103, %v1105
    %v1107 = vrot.slane %v1093, %v1106
    %v1108 = vcombine.high %v1100, %v1100
    %v1109 = vcombine.high %v1107, %v1107
    %v1114 = vadd.f32 %v1083, %v1100
    %v1115 = vadd.f32 %v1084, %v1108
    %v1116 = vadd.f32 %v1085, %v1107
    %v1117 = vadd.f32 %v1086, %v1109
    %v1118 = vmax.f32 %v1114, 0.0
    %v1119 = vmax.f32 %v1115, 0.0
    %v1120 = vmax.f32 %v1116, 0.0
    %v1121 = vmax.f32 %v1117, 0.0
    %v1126 = vcombine.low %v1118, %v1119
    %v1127 = vcombine.low %v1120, %v1121
    %v1129 = vunpack.c.l.s4 1983009808
    %v1130 = vunpack.c.0.s8 %v1129
    %v1131 = vlaneseq
    %v1132 = vshrl.u32 %v1131, 7
    %v1133 = vsub.s32 %v1130, %v1132
    %v1134 = vrot.slane %v1126, %v1133
    %v1136 = vunpack.c.l.s4 1983009808
    %v1137 = vunpack.c.0.s8 %v1136
    %v1138 = vlaneseq
    %v1139 = vshrl.u32 %v1138, 7
    %v1140 = vsub.s32 %v1137, %v1139
    %v1141 = vrot.slane %v1127, %v1140
    %v1142 = vcombine.low %v1134, %v1141
    %v1144 = vpack.c.bf16 %v1142, %v1142
    %vm1145 = vcmask 778240
    %1146 = vst.msk [vmem:[#allocation4] sm:$0x1] %vm1145, 0
    %vm1147 = vcmask 779265
    %1148 = vst.msk [vmem:[#allocation4 + $0x4] sm:$0x2] %vm1147, 0
    %vm1149 = vcmask 125952
    %1150 = vst.msk [vmem:[#allocation4] sm:$0xf] %vm1149, 0
    %vm1151 = vcmask 123904
    %1152 = vst.msk [vmem:[#allocation4 + $0x4] sm:$0x3] %vm1151, 0
    %vm1153 = vcmask 781952
    %1154 = vst.msk [vmem:[#allocation4] sm:$0xf] %vm1153, 0
    %vm1155 = vcmask 779904
    %1156 = vst.msk [vmem:[#allocation4 + $0x4] sm:$0x3] %vm1155, 0
    %v1158 = vunpack.c.l.b16 %v1144
    %v1159 = vpack.c.b16 %v1158, %v1158
    %v1160 = vrot.slane %v1159, 7
    %v1161 = vrot.slane %v1160, 4
    %1162 = vrot.lane.b32.xlu0 %v1160, 16
    %v1163 = vpop.permute.xlu0 %1162
    %1164 = vrot.lane.b32.xlu0 %v1161, 16
    %v1165 = vpop.permute.xlu0 %1164
    %vm1168 = vcmask 650369
    %1169 = vst.msk [vmem:[#allocation4] sm:$0xe] %vm1168, %v1163
    %vm1170 = vcmask 647296
    %1171 = vst.msk [vmem:[#allocation4 + $0x4] sm:$0x1] %vm1170, %v1165
    %v1172 = vld [vmem:[#allocation4] sm:$0xf]
    %v1173 = vld [vmem:[%s5] sm:$0xf]
    %v1174 = vld [vmem:[%s5 + $0x4] sm:$0xf]
    %v1175 = vld [vmem:[%s5 + $0x8] sm:$0xf]
    %v1176 = vld [vmem:[%s5 + $0xc] sm:$0xf]
    %v1177 = vld [vmem:[%s5 + $0x10] sm:$0xf]
    %v1178 = vld [vmem:[%s5 + $0x14] sm:$0xf]
    %v1179 = vld [vmem:[%s5 + $0x18] sm:$0xf]
    %v1180 = vld [vmem:[%s5 + $0x1c] sm:$0xf]
    %v1181 = vld [vmem:[%s5 + $0x20] sm:$0xf]
    %v1182 = vld [vmem:[%s5 + $0x24] sm:$0xf]
    %v1183 = vld [vmem:[%s5 + $0x28] sm:$0xf]
    %v1184 = vld [vmem:[%s5 + $0x2c] sm:$0xf]
    %v1185 = vld [vmem:[#allocation4] sm:$0xe]
    %v1186 = vld [vmem:[#allocation4 + $0x4] sm:$0x1]
    %s1187 = scalar_lea.vmem %s5, 48
    %v1188 = vld [vmem:[%s1187] sm:$0xf]
    %v1189 = vld [vmem:[%s1187 + $0x4] sm:$0xf]
    %v1190 = vld [vmem:[%s1187 + $0x8] sm:$0xf]
    %v1191 = vld [vmem:[%s1187 + $0xc] sm:$0xf]
    %v1192 = vld [vmem:[%s1187 + $0x10] sm:$0xf]
    %v1193 = vld [vmem:[%s1187 + $0x14] sm:$0xf]
    %v1194 = vld [vmem:[%s1187 + $0x18] sm:$0xf]
    %v1195 = vld [vmem:[%s1187 + $0x1c] sm:$0xf]
    %v1196 = vld [vmem:[%s1187 + $0x20] sm:$0xf]
    %v1197 = vld [vmem:[%s1187 + $0x24] sm:$0xf]
    %v1198 = vld [vmem:[%s1187 + $0x28] sm:$0xf]
    %v1199 = vld [vmem:[%s1187 + $0x2c] sm:$0xf]
    %v1202 = vunpack.c.l.b16 %v1185
    %v1203 = vunpack.c.l.b16 %v1186
    %v1204 = vpack.c.b16 %v1203, %v1202
    %v1205 = vrot.slane %v1204, 1
    %v1218 = vunpack.c.l.b16 %v1188
    %v1219 = vunpack.c.l.b16 %v1189
    %v1220 = vunpack.c.l.b16 %v1190
    %v1221 = vunpack.c.l.b16 %v1191
    %v1222 = vunpack.c.l.b16 %v1192
    %v1223 = vunpack.c.l.b16 %v1193
    %v1224 = vunpack.c.l.b16 %v1194
    %v1225 = vunpack.c.l.b16 %v1195
    %v1226 = vunpack.c.l.b16 %v1196
    %v1227 = vunpack.c.l.b16 %v1197
    %v1228 = vunpack.c.l.b16 %v1198
    %v1229 = vunpack.c.l.b16 %v1199
    %v1230 = vpack.c.b16 %v1219, %v1218
    %v1231 = vpack.c.b16 %v1221, %v1220
    %v1232 = vpack.c.b16 %v1223, %v1222
    %v1233 = vpack.c.b16 %v1225, %v1224
    %v1234 = vpack.c.b16 %v1227, %v1226
    %v1235 = vpack.c.b16 %v1229, %v1228
    %vm1242 = vcmask 785408
    %v1244 = vsel %vm1242, %v1205, 0
    %1246 = vmatprep.subr.bf16.mxu0 0
    %1247 = vmatpush1.bf16.msra.mxu0 %v1230
    %1248 = vmatprep.subr.bf16.mxu0 0
    %1249 = vmatpush1.bf16.msra.mxu0 %v1231
    %1250 = vmatprep.subr.bf16.mxu0 0
    %1251 = vmatpush1.bf16.msra.mxu0 %v1232
    %1252 = vmatprep.subr.bf16.mxu0 0
    %1253 = vmatpush1.bf16.msra.mxu0 %v1233
    %1254 = vmatprep.subr.bf16.mxu0 0
    %1255 = vmatpush1.bf16.msra.mxu0 %v1234
    %1256 = vmatprep.subr.bf16.mxu0 0
    %1257 = vmatpush1.bf16.msra.mxu0 %v1235
    %1258 = vmatprep.subr.bf16.mxu0 0
    %1259 = vmatpush1.bf16.msra.mxu0 0
    %1260 = vmatprep.subr.bf16.mxu0 0
    %1261 = vmatpush1.bf16.msra.mxu0 0
    %1262 = vmatprep.subr.bf16.mxu0 0
    %1263 = vmatpush1.bf16.msra.mxu0 0
    %1264 = vmatprep.subr.bf16.mxu0 0
    %1265 = vmatpush1.bf16.msra.mxu0 0
    %1266 = vmatprep.subr.bf16.mxu0 0
    %1267 = vmatpush1.bf16.msra.mxu0 0
    %1268 = vmatprep.subr.bf16.mxu0 0
    %1269 = vmatpush1.bf16.msra.mxu0 0
    %1270 = vmatprep.subr.bf16.mxu0 0
    %1271 = vmatpush1.bf16.msra.mxu0 0
    %1272 = vmatprep.subr.bf16.mxu0 0
    %1273 = vmatpush1.bf16.msra.mxu0 0
    %1274 = vmatprep.subr.bf16.mxu0 0
    %1275 = vmatpush1.bf16.msra.mxu0 0
    %1276 = vmatprep.subr.bf16.mxu0 0
    %1277 = vmatpush1.bf16.msra.mxu0 0
    %1278 = vmatprep.mubr.bf16.mxu0 0
    %1279 = vmatmul.mubr.bf16.gmra.mrb[0].mxu0 %v1244
    %v1280 = vpop.f32.mrb[0].mxu0
    %v1281 = vadd.f32 0.0, %v1280
    %v1282 = vpop.f32.mrb[0].mxu0
    %v1283 = vpop.f32.mrb[0].mxu0
    %v1284 = vpop.f32.mrb[0].mxu0
    %1285 = vdwg.mxu0
    %v1298 = vunpack.c.l.b16 %v1173
    %v1299 = vunpack.c.l.b16 %v1174
    %v1300 = vunpack.c.l.b16 %v1175
    %v1301 = vunpack.c.l.b16 %v1176
    %v1302 = vunpack.c.l.b16 %v1177
    %v1303 = vunpack.c.l.b16 %v1178
    %v1304 = vunpack.c.l.b16 %v1179
    %v1305 = vunpack.c.l.b16 %v1180
    %v1306 = vunpack.c.l.b16 %v1181
    %v1307 = vunpack.c.l.b16 %v1182
    %v1308 = vunpack.c.l.b16 %v1183
    %v1309 = vunpack.c.l.b16 %v1184
    %v1310 = vpack.c.b16 %v1299, %v1298
    %v1311 = vpack.c.b16 %v1301, %v1300
    %v1312 = vpack.c.b16 %v1303, %v1302
    %v1313 = vpack.c.b16 %v1305, %v1304
    %v1314 = vpack.c.b16 %v1307, %v1306
    %v1315 = vpack.c.b16 %v1309, %v1308
    %v1323 = vsel %vm1242, %v1172, 0
    %1325 = vmatprep.subr.bf16.mxu0 0
    %1326 = vmatpush1.bf16.msra.mxu0 %v1310
    %1327 = vmatprep.subr.bf16.mxu0 0
    %1328 = vmatpush1.bf16.msra.mxu0 %v1311
    %1329 = vmatprep.subr.bf16.mxu0 0
    %1330 = vmatpush1.bf16.msra.mxu0 %v1312
    %1331 = vmatprep.subr.bf16.mxu0 0
    %1332 = vmatpush1.bf16.msra.mxu0 %v1313
    %1333 = vmatprep.subr.bf16.mxu0 0
    %1334 = vmatpush1.bf16.msra.mxu0 %v1314
    %1335 = vmatprep.subr.bf16.mxu0 0
    %1336 = vmatpush1.bf16.msra.mxu0 %v1315
    %1337 = vmatprep.subr.bf16.mxu0 0
    %1338 = vmatpush1.bf16.msra.mxu0 0
    %1339 = vmatprep.subr.bf16.mxu0 0
    %1340 = vmatpush1.bf16.msra.mxu0 0
    %1341 = vmatprep.subr.bf16.mxu0 0
    %1342 = vmatpush1.bf16.msra.mxu0 0
    %1343 = vmatprep.subr.bf16.mxu0 0
    %1344 = vmatpush1.bf16.msra.mxu0 0
    %1345 = vmatprep.subr.bf16.mxu0 0
    %1346 = vmatpush1.bf16.msra.mxu0 0
    %1347 = vmatprep.subr.bf16.mxu0 0
    %1348 = vmatpush1.bf16.msra.mxu0 0
    %1349 = vmatprep.subr.bf16.mxu0 0
    %1350 = vmatpush1.bf16.msra.mxu0 0
    %1351 = vmatprep.subr.bf16.mxu0 0
    %1352 = vmatpush1.bf16.msra.mxu0 0
    %1353 = vmatprep.subr.bf16.mxu0 0
    %1354 = vmatpush1.bf16.msra.mxu0 0
    %1355 = vmatprep.subr.bf16.mxu0 0
    %1356 = vmatpush1.bf16.msra.mxu0 0
    %1357 = vmatprep.mubr.bf16.mxu0 0
    %1358 = vmatmul.mubr.bf16.gmra.mrb[0].mxu0 %v1323
    %v1359 = vpop.f32.mrb[0].mxu0
    %v1360 = vadd.f32 %v1281, %v1359
    %v1361 = vpop.f32.mrb[0].mxu0
    %v1362 = vpop.f32.mrb[0].mxu0
    %v1363 = vpop.f32.mrb[0].mxu0
    %1364 = vdwg.mxu0
    %v1365 = vld [vmem:[#allocation4] sm:$0xc]
    %v1366 = vld [vmem:[#allocation4 + $0x4] sm:$0x3]
    %s1367 = scalar_lea.vmem %s5, 96
    %v1368 = vld [vmem:[%s1367] sm:$0xf]
    %v1369 = vld [vmem:[%s1367 + $0x4] sm:$0xf]
    %v1370 = vld [vmem:[%s1367 + $0x8] sm:$0xf]
    %v1371 = vld [vmem:[%s1367 + $0xc] sm:$0xf]
    %v1372 = vld [vmem:[%s1367 + $0x10] sm:$0xf]
    %v1373 = vld [vmem:[%s1367 + $0x14] sm:$0xf]
    %v1374 = vld [vmem:[%s1367 + $0x18] sm:$0xf]
    %v1375 = vld [vmem:[%s1367 + $0x1c] sm:$0xf]
    %v1376 = vld [vmem:[%s1367 + $0x20] sm:$0xf]
    %v1377 = vld [vmem:[%s1367 + $0x24] sm:$0xf]
    %v1378 = vld [vmem:[%s1367 + $0x28] sm:$0xf]
    %v1379 = vld [vmem:[%s1367 + $0x2c] sm:$0xf]
    %v1382 = vunpack.c.l.b16 %v1365
    %v1383 = vunpack.c.l.b16 %v1366
    %v1384 = vpack.c.b16 %v1383, %v1382
    %v1385 = vrot.slane %v1384, 2
    %v1398 = vunpack.c.l.b16 %v1368
    %v1399 = vunpack.c.l.b16 %v1369
    %v1400 = vunpack.c.l.b16 %v1370
    %v1401 = vunpack.c.l.b16 %v1371
    %v1402 = vunpack.c.l.b16 %v1372
    %v1403 = vunpack.c.l.b16 %v1373
    %v1404 = vunpack.c.l.b16 %v1374
    %v1405 = vunpack.c.l.b16 %v1375
    %v1406 = vunpack.c.l.b16 %v1376
    %v1407 = vunpack.c.l.b16 %v1377
    %v1408 = vunpack.c.l.b16 %v1378
    %v1409 = vunpack.c.l.b16 %v1379
    %v1410 = vpack.c.b16 %v1399, %v1398
    %v1411 = vpack.c.b16 %v1401, %v1400
    %v1412 = vpack.c.b16 %v1403, %v1402
    %v1413 = vpack.c.b16 %v1405, %v1404
    %v1414 = vpack.c.b16 %v1407, %v1406
    %v1415 = vpack.c.b16 %v1409, %v1408
    %v1423 = vsel %vm1242, %v1385, 0
    %1425 = vmatprep.subr.bf16.mxu0 0
    %1426 = vmatpush1.bf16.msra.mxu0 %v1410
    %1427 = vmatprep.subr.bf16.mxu0 0
    %1428 = vmatpush1.bf16.msra.mxu0 %v1411
    %1429 = vmatprep.subr.bf16.mxu0 0
    %1430 = vmatpush1.bf16.msra.mxu0 %v1412
    %1431 = vmatprep.subr.bf16.mxu0 0
    %1432 = vmatpush1.bf16.msra.mxu0 %v1413
    %1433 = vmatprep.subr.bf16.mxu0 0
    %1434 = vmatpush1.bf16.msra.mxu0 %v1414
    %1435 = vmatprep.subr.bf16.mxu0 0
    %1436 = vmatpush1.bf16.msra.mxu0 %v1415
    %1437 = vmatprep.subr.bf16.mxu0 0
    %1438 = vmatpush1.bf16.msra.mxu0 0
    %1439 = vmatprep.subr.bf16.mxu0 0
    %1440 = vmatpush1.bf16.msra.mxu0 0
    %1441 = vmatprep.subr.bf16.mxu0 0
    %1442 = vmatpush1.bf16.msra.mxu0 0
    %1443 = vmatprep.subr.bf16.mxu0 0
    %1444 = vmatpush1.bf16.msra.mxu0 0
    %1445 = vmatprep.subr.bf16.mxu0 0
    %1446 = vmatpush1.bf16.msra.mxu0 0
    %1447 = vmatprep.subr.bf16.mxu0 0
    %1448 = vmatpush1.bf16.msra.mxu0 0
    %1449 = vmatprep.subr.bf16.mxu0 0
    %1450 = vmatpush1.bf16.msra.mxu0 0
    %1451 = vmatprep.subr.bf16.mxu0 0
    %1452 = vmatpush1.bf16.msra.mxu0 0
    %1453 = vmatprep.subr.bf16.mxu0 0
    %1454 = vmatpush1.bf16.msra.mxu0 0
    %1455 = vmatprep.subr.bf16.mxu0 0
    %1456 = vmatpush1.bf16.msra.mxu0 0
    %1457 = vmatprep.mubr.bf16.mxu0 0
    %1458 = vmatmul.mubr.bf16.gmra.mrb[0].mxu0 %v1423
    %v1459 = vpop.f32.mrb[0].mxu0
    %v1460 = vadd.f32 0.0, %v1459
    %v1461 = vpop.f32.mrb[0].mxu0
    %v1462 = vpop.f32.mrb[0].mxu0
    %v1463 = vpop.f32.mrb[0].mxu0
    %1464 = vdwg.mxu0
    %v1465 = vadd.f32 %v1360, %v1460
    %1467 = vrot.lane.b32.xlu0 %v1465, 96
    %v1468 = vpop.permute.xlu0 %1467
    %v1470 = vmax.f32 %v1465, %v1468
    %v1472 = vcombine.high %v1470, %v1470
    %v1474 = vrot.slane %v1470, 6
    %v1475 = vrot.slane %v1474, 4
    %v1476 = vrot.slane %v1472, 6
    %v1477 = vrot.slane %v1476, 4
    %v1480 = vmax.f32 %v1470, %v1475
    %v1481 = vmax.f32 %v1472, %v1477
    %v1482 = vld [vmem:[#allocation8] sm:$0x1]
    %v1484 = vlaneseq
    %v1485 = vshrl.u32 %v1484, 7
    %v1486 = vsub.s32 0, %v1485
    %v1487 = vrot.slane %v1482, %v1486
    %v1489 = vunpack.c.l.s4 1983009808
    %v1490 = vunpack.c.0.s8 %v1489
    %v1491 = vlaneseq
    %v1492 = vshrl.u32 %v1491, 7
    %v1493 = vsub.s32 %v1490, %v1492
    %v1494 = vrot.slane %v1487, %v1493
    %v1495 = vcombine.high %v1494, %v1494
    %v1498 = vadd.f32 %v1480, %v1494
    %v1499 = vadd.f32 %v1481, %v1495
    %v1500 = vmax.f32 %v1498, 0.0
    %v1501 = vmax.f32 %v1499, 0.0
    %v1504 = vcombine.low %v1500, %v1501
    %v1506 = vunpack.c.l.s4 1983009808
    %v1507 = vunpack.c.0.s8 %v1506
    %v1508 = vlaneseq
    %v1509 = vshrl.u32 %v1508, 7
    %v1510 = vsub.s32 %v1507, %v1509
    %v1511 = vrot.slane %v1504, %v1510
    %v1513 = vpack.c.bf16 %v1511, %v1511
    %v1514 = vld [vmem:[%s7] sm:$0xf]
    %v1515 = vld [vmem:[%s7 + $0x4] sm:$0xf]
    %v1516 = vld [vmem:[%s7 + $0x8] sm:$0xf]
    %v1517 = vld [vmem:[%s7 + $0xc] sm:$0xf]
    %s1518 = scalar_lea.vmem %s7, 16
    %v1519 = vld [vmem:[%s1518] sm:$0xf]
    %v1520 = vld [vmem:[%s1518 + $0x4] sm:$0xf]
    %v1521 = vld [vmem:[%s1518 + $0x8] sm:$0xf]
    %v1522 = vld [vmem:[%s1518 + $0xc] sm:$0xf]
    %v1524 = vrot.slane %v1513, 1
    %v1529 = vunpack.c.l.b16 %v1519
    %v1530 = vunpack.c.l.b16 %v1520
    %v1531 = vunpack.c.l.b16 %v1521
    %v1532 = vunpack.c.l.b16 %v1522
    %v1533 = vpack.c.b16 %v1530, %v1529
    %v1534 = vpack.c.b16 %v1532, %v1531
    %vm1537 = vcmask 261120
    %v1539 = vsel %vm1537, %v1524, 0
    %1541 = vmatprep.subr.bf16.mxu0 0
    %1542 = vmatpush1.bf16.msra.mxu0 %v1533
    %1543 = vmatprep.subr.bf16.mxu0 0
    %1544 = vmatpush1.bf16.msra.mxu0 %v1534
    %1545 = vmatprep.subr.bf16.mxu0 0
    %1546 = vmatpush1.bf16.msra.mxu0 0
    %1547 = vmatprep.subr.bf16.mxu0 0
    %1548 = vmatpush1.bf16.msra.mxu0 0
    %1549 = vmatprep.subr.bf16.mxu0 0
    %1550 = vmatpush1.bf16.msra.mxu0 0
    %1551 = vmatprep.subr.bf16.mxu0 0
    %1552 = vmatpush1.bf16.msra.mxu0 0
    %1553 = vmatprep.subr.bf16.mxu0 0
    %1554 = vmatpush1.bf16.msra.mxu0 0
    %1555 = vmatprep.subr.bf16.mxu0 0
    %1556 = vmatpush1.bf16.msra.mxu0 0
    %1557 = vmatprep.subr.bf16.mxu0 0
    %1558 = vmatpush1.bf16.msra.mxu0 0
    %1559 = vmatprep.subr.bf16.mxu0 0
    %1560 = vmatpush1.bf16.msra.mxu0 0
    %1561 = vmatprep.subr.bf16.mxu0 0
    %1562 = vmatpush1.bf16.msra.mxu0 0
    %1563 = vmatprep.subr.bf16.mxu0 0
    %1564 = vmatpush1.bf16.msra.mxu0 0
    %1565 = vmatprep.subr.bf16.mxu0 0
    %1566 = vmatpush1.bf16.msra.mxu0 0
    %1567 = vmatprep.subr.bf16.mxu0 0
    %1568 = vmatpush1.bf16.msra.mxu0 0
    %1569 = vmatprep.subr.bf16.mxu0 0
    %1570 = vmatpush1.bf16.msra.mxu0 0
    %1571 = vmatprep.subr.bf16.mxu0 0
    %1572 = vmatpush1.bf16.msra.mxu0 0
    %1573 = vmatprep.mubr.bf16.mxu0 0
    %1574 = vmatmul.mubr.bf16.gmra.mrb[0].mxu0 %v1539
    %v1575 = vpop.f32.mrb[0].mxu0
    %v1576 = vadd.f32 0.0, %v1575
    %v1577 = vpop.f32.mrb[0].mxu0
    %v1578 = vpop.f32.mrb[0].mxu0
    %v1579 = vpop.f32.mrb[0].mxu0
    %1580 = vdwg.mxu0
    %v1585 = vunpack.c.l.b16 %v1514
    %v1586 = vunpack.c.l.b16 %v1515
    %v1587 = vunpack.c.l.b16 %v1516
    %v1588 = vunpack.c.l.b16 %v1517
    %v1589 = vpack.c.b16 %v1586, %v1585
    %v1590 = vpack.c.b16 %v1588, %v1587
    %v1594 = vsel %vm1537, %v1513, 0
    %1596 = vmatprep.subr.bf16.mxu0 0
    %1597 = vmatpush1.bf16.msra.mxu0 %v1589
    %1598 = vmatprep.subr.bf16.mxu0 0
    %1599 = vmatpush1.bf16.msra.mxu0 %v1590
    %1600 = vmatprep.subr.bf16.mxu0 0
    %1601 = vmatpush1.bf16.msra.mxu0 0
    %1602 = vmatprep.subr.bf16.mxu0 0
    %1603 = vmatpush1.bf16.msra.mxu0 0
    %1604 = vmatprep.subr.bf16.mxu0 0
    %1605 = vmatpush1.bf16.msra.mxu0 0
    %1606 = vmatprep.subr.bf16.mxu0 0
    %1607 = vmatpush1.bf16.msra.mxu0 0
    %1608 = vmatprep.subr.bf16.mxu0 0
    %1609 = vmatpush1.bf16.msra.mxu0 0
    %1610 = vmatprep.subr.bf16.mxu0 0
    %1611 = vmatpush1.bf16.msra.mxu0 0
    %1612 = vmatprep.subr.bf16.mxu0 0
    %1613 = vmatpush1.bf16.msra.mxu0 0
    %1614 = vmatprep.subr.bf16.mxu0 0
    %1615 = vmatpush1.bf16.msra.mxu0 0
    %1616 = vmatprep.subr.bf16.mxu0 0
    %1617 = vmatpush1.bf16.msra.mxu0 0
    %1618 = vmatprep.subr.bf16.mxu0 0
    %1619 = vmatpush1.bf16.msra.mxu0 0
    %1620 = vmatprep.subr.bf16.mxu0 0
    %1621 = vmatpush1.bf16.msra.mxu0 0
    %1622 = vmatprep.subr.bf16.mxu0 0
    %1623 = vmatpush1.bf16.msra.mxu0 0
    %1624 = vmatprep.subr.bf16.mxu0 0
    %1625 = vmatpush1.bf16.msra.mxu0 0
    %1626 = vmatprep.subr.bf16.mxu0 0
    %1627 = vmatpush1.bf16.msra.mxu0 0
    %1628 = vmatprep.mubr.bf16.mxu0 0
    %1629 = vmatmul.mubr.bf16.gmra.mrb[0].mxu0 %v1594
    %v1630 = vpop.f32.mrb[0].mxu0
    %v1631 = vadd.f32 %v1576, %v1630
    %v1632 = vpop.f32.mrb[0].mxu0
    %v1633 = vpop.f32.mrb[0].mxu0
    %v1634 = vpop.f32.mrb[0].mxu0
    %1635 = vdwg.mxu0
    %v1636 = vld [vmem:[%s8] sm:$0x1]
    %v1638 = vlaneseq
    %v1639 = vshrl.u32 %v1638, 7
    %v1640 = vsub.s32 0, %v1639
    %v1641 = vrot.slane %v1636, %v1640
    %v1643 = vadd.f32 %v1631, %v1641
    %1644 = vst [vmem:[#allocation10] sm:$0x3] %v1643
    // Predicated region
    $region46: #{tpu_custom_call.1} parent=1 // pred_check
      _
    $region47: #{tpu_custom_call.1} parent=1 // pred_check_branch
      %1646 = sbr.rel (0) target = $region49
    $region48: #{tpu_custom_call.1} parent=1 // pred_region
      %s1648 = ssub.s32 32, 32
      %1649 = vsyncadd [#allocation7], %s1648
      %s1651 = sshll.u32 [#allocation10], 4
      %s1652 = int_to_ptr.vmem [resolvable:$true] %s1651
      %1654 = dma.vmem_to_hbm [thread:$0]  %s1652, 32, %s9, [#allocation7]
    $region49: #{tpu_custom_call.1} parent=1 // pred_fallthru
      _
    // Predicated region
    $region50: #{tpu_custom_call.1} parent=1 // pred_check
      _
    $region51: #{tpu_custom_call.1} parent=1 // pred_check_branch
      %1656 = sbr.rel (0) target = $region53
    $region52: #{tpu_custom_call.1} parent=1 // pred_region
      %1657 = dma.done [#allocation7], 32
    $region53: #{tpu_custom_call.1} parent=1 // pred_fallthru
      _
    %1658 = vsyncpa [#allocation6], 1
    %1659 = vsyncpa [#allocation9], 1
    %1660 = vsyncpa [#allocation7], 1

</llo_original>
